<compile_context>
chip_gen: v7x
topology: tpu7x:2x2x1
jax: 0.10.0
libtpu: 0.0.40
codegen_flags: <defaults>
</compile_context>

<pallas_src>
import jax
import jax.numpy as jnp
from jax.experimental import pallas as pl

# ----------------------------- tiny-BERT config -----------------------------
BATCH = 2
SEQ = 8
HIDDEN = 32
NUM_HEADS = 2
HEAD_DIM = HIDDEN // NUM_HEADS
FFN = 64
VOCAB = 64          # shared for input embedding table and fc output head
VOCAB_PAD = 128     # lane-dense padded vocab for the HBM logits store
NUM_LAYERS = 2
LN_EPS = 1e-12
INIT_STD = 0.02

assert SEQ & (SEQ - 1) == 0, "SEQ must be a power of two (batch-id via shift)"
_SEQ_SHIFT = SEQ.bit_length() - 1
_CONST_ROWS = 3 + 8 * NUM_LAYERS          # emb_ln(2) + 8/layer + fc_b(1)
_FC_ROW = 2 + 8 * NUM_LAYERS


# ------------------------------ fused Pallas kernel ------------------------------
def _bertsum_kernel(ids_ref, mask_ref, word_emb_ref, pos_type_ref,
                    const_ref, attn_w_ref, ffn_w_ref, logits_ref):
    """Whole BERTSum forward on VMEM-resident tensors.

    ids_ref:      [B*S, 1]   int32 token ids
    mask_ref:     [1, B*S]   f32 attention mask (1 = keep, 0 = pad), key-major
    word_emb_ref: [VOCAB, H] bf16 word-embedding table
    pos_type_ref: [B*S, H]   f32 precomputed (position + token-type) embeddings
    const_ref:    [19, 128]  f32 slab: all biases / LayerNorm params (see pack_params)
    attn_w_ref:   [L+1, H, 128] bf16: per layer [Wq*scale | Wk | Wv | Wo]; last = fc_w
    ffn_w_ref:    [L, H+FFN, FFN] bf16: rows 0:H = W1, rows H: = W2 (lanes 0:H)
    logits_ref:   [B*S, VOCAB_PAD] f32 output (lane-dense padded vocab)
    """
    f32 = jnp.float32
    bf16 = jnp.bfloat16
    BS = BATCH * SEQ

    def layer_norm(x, g_row, b_row):
        mu = jnp.mean(x, axis=-1, keepdims=True)
        var = jnp.mean((x - mu) * (x - mu), axis=-1, keepdims=True)
        return (x - mu) * jax.lax.rsqrt(var + LN_EPS) * g_row + b_row

    def crow(r, n):                       # [1, n] f32 row from the constants slab
        return const_ref[r:r + 1, :n]

    # ---- embedding: one-hot gather on the MXU + (pos + type) + LayerNorm ----
    ids = ids_ref[...]                                                    # [BS, 1]
    vocab_iota = jax.lax.broadcasted_iota(jnp.int32, (BS, VOCAB), 1)
    onehot = jnp.where(ids == vocab_iota, 1.0, 0.0).astype(bf16)          # [BS, VOCAB]
    word = jnp.dot(onehot, word_emb_ref[...], preferred_element_type=f32)  # [BS, H]
    h = layer_norm(word + pos_type_ref[...], crow(0, HIDDEN), crow(1, HIDDEN))

    # ---- additive attention bias (same-batch block-diag + key padding), once ----
    row_i = jax.lax.broadcasted_iota(jnp.int32, (BS, BS), 0)
    col_i = jax.lax.broadcasted_iota(jnp.int32, (BS, BS), 1)
    same_batch = (jax.lax.shift_right_logical(row_i, _SEQ_SHIFT)
                  == jax.lax.shift_right_logical(col_i, _SEQ_SHIFT))
    keep = jnp.logical_and(same_batch, mask_ref[...] > 0.5)               # [BS, BS]
    bias = jnp.where(keep, 0.0, -10000.0).astype(f32)

    for li in range(NUM_LAYERS):
        base = 2 + 8 * li
        w_l = attn_w_ref[li]                                              # [H, 128] bf16
        h_bf = h.astype(bf16)                                             # cast once

        # --------------------- multi-head self-attention ---------------------
        # fused QKV projection: one matmul per layer (scale folded into Wq/bq)
        qkv = jnp.dot(h_bf, w_l[:, :3 * HIDDEN],
                      preferred_element_type=f32) + crow(base + 0, 3 * HIDDEN)
        ctx = []
        for hh in range(NUM_HEADS):
            q = qkv[:, hh * HEAD_DIM:(hh + 1) * HEAD_DIM]
            k = qkv[:, HIDDEN + hh * HEAD_DIM:HIDDEN + (hh + 1) * HEAD_DIM]
            v = qkv[:, 2 * HIDDEN + hh * HEAD_DIM:2 * HIDDEN + (hh + 1) * HEAD_DIM]
            s = jax.lax.dot_general(q.astype(bf16), k.astype(bf16),
                                    (((1,), (1,)), ((), ())),
                                    preferred_element_type=f32) + bias     # [BS, BS]
            s = s - jnp.max(s, axis=-1, keepdims=True)
            p = jnp.exp(s)
            p = p * pl.reciprocal(jnp.sum(p, axis=-1, keepdims=True), approx=True)
            ctx.append(jnp.dot(p.astype(bf16), v.astype(bf16),
                               preferred_element_type=f32))                # [BS, HD]
        ctx_all = jnp.concatenate(ctx, axis=-1)                            # [BS, H]
        attn = jnp.dot(ctx_all.astype(bf16), w_l[:, 3 * HIDDEN:],
                       preferred_element_type=f32) + crow(base + 1, HIDDEN)
        h = layer_norm(attn + h, crow(base + 2, HIDDEN), crow(base + 3, HIDDEN))

        # ------------------------------ FFN ------------------------------
        ffn_l = ffn_w_ref[li]                                              # [H+FFN, FFN]
        w1 = ffn_l[:HIDDEN, :]                                             # [H, FFN]
        w2 = ffn_l[HIDDEN:, :HIDDEN]                                       # [FFN, H]
        h_bf = h.astype(bf16)
        f = jnp.dot(h_bf, w1, preferred_element_type=f32) + crow(base + 4, FFN)
        # TODO(synk): HF BERT uses exact (erf) GELU; tanh approximation used here.
        f = jax.nn.gelu(f, approximate=True)
        f = jnp.dot(f.astype(bf16), w2, preferred_element_type=f32) + crow(base + 5, HIDDEN)
        h = layer_norm(f + h, crow(base + 6, HIDDEN), crow(base + 7, HIDDEN))

    # ---- final vocab projection (lane-dense, padded-to-128 store) ----
    logits = jnp.dot(h.astype(bf16), attn_w_ref[NUM_LAYERS],
                     preferred_element_type=f32) + crow(_FC_ROW, VOCAB_PAD)
    logits_ref[...] = logits.astype(logits_ref.dtype)


def _full_spec(shape):
    zero = (0,) * len(shape)
    return pl.BlockSpec(shape, lambda: zero)


# ------------------------------ parameter init ------------------------------
def init_params(key):
    def dense(k, fan_in, fan_out):
        kw, = jax.random.split(k, 1)
        w = jax.random.normal(kw, (fan_in, fan_out), jnp.float32) * INIT_STD
        b = jnp.zeros((fan_out,), jnp.float32)
        return w, b

    keys = jax.random.split(key, 4 + NUM_LAYERS)
    params = {
        "word_emb": jax.random.normal(keys[0], (VOCAB, HIDDEN), jnp.float32) * INIT_STD,
        "pos_emb": jax.random.normal(keys[1], (SEQ, HIDDEN), jnp.float32) * INIT_STD,
        "type_emb": jax.random.normal(keys[2], (1, HIDDEN), jnp.float32) * INIT_STD,
        "emb_ln_g": jnp.ones((HIDDEN,), jnp.float32),
        "emb_ln_b": jnp.zeros((HIDDEN,), jnp.float32),
        "layers": [],
    }
    for li in range(NUM_LAYERS):
        lk = jax.random.split(keys[4 + li], 6)
        wq, bq = dense(lk[0], HIDDEN, HIDDEN)
        wk, bk = dense(lk[1], HIDDEN, HIDDEN)
        wv, bv = dense(lk[2], HIDDEN, HIDDEN)
        wo, bo = dense(lk[3], HIDDEN, HIDDEN)
        w1, b1 = dense(lk[4], HIDDEN, FFN)
        w2, b2 = dense(lk[5], FFN, HIDDEN)
        params["layers"].append({
            "wq": wq, "bq": bq, "wk": wk, "bk": bk, "wv": wv, "bv": bv,
            "wo": wo, "bo": bo,
            "ln1_g": jnp.ones((HIDDEN,), jnp.float32), "ln1_b": jnp.zeros((HIDDEN,), jnp.float32),
            "w1": w1, "b1": b1, "w2": w2, "b2": b2,
            "ln2_g": jnp.ones((HIDDEN,), jnp.float32), "ln2_b": jnp.zeros((HIDDEN,), jnp.float32),
        })
    fc_w, fc_b = dense(keys[3], HIDDEN, VOCAB)
    params["fc_w"] = fc_w
    params["fc_b"] = fc_b
    return params


def pack_params(params):
    """Pack / fuse / cast weights ONCE (outside jit) into 5 kernel-ready slabs.

    - const:    f32 [19, 128]   all biases + LayerNorm params, one row each
    - attn_w:   bf16 [L+1, H, 128]  per layer [Wq*scale | Wk | Wv | Wo]; last = fc_w
    - ffn_w:    bf16 [L, H+FFN, FFN]  rows 0:H = W1, rows H: (lanes 0:H) = W2
    - word_emb: bf16 [VOCAB, H]
    - pos_type: f32  [B*S, H]  precomputed position + token-type embeddings
    """
    bf16 = jnp.bfloat16
    scale = 1.0 / (HEAD_DIM ** 0.5)

    const = jnp.zeros((_CONST_ROWS, 128), jnp.float32)

    def put(c, r, v):
        v = jnp.asarray(v, jnp.float32).reshape(1, -1)
        return c.at[r:r + 1, :v.shape[1]].set(v)

    const = put(const, 0, params["emb_ln_g"])
    const = put(const, 1, params["emb_ln_b"])
    for li, lp in enumerate(params["layers"]):
        base = 2 + 8 * li
        bqkv = jnp.concatenate([lp["bq"] * scale, lp["bk"], lp["bv"]])   # scale folded
        const = put(const, base + 0, bqkv)
        const = put(const, base + 1, lp["bo"])
        const = put(const, base + 2, lp["ln1_g"])
        const = put(const, base + 3, lp["ln1_b"])
        const = put(const, base + 4, lp["b1"])
        const = put(const, base + 5, lp["b2"])
        const = put(const, base + 6, lp["ln2_g"])
        const = put(const, base + 7, lp["ln2_b"])
    const = put(const, _FC_ROW, params["fc_b"])

    attn_w = jnp.zeros((NUM_LAYERS + 1, HIDDEN, 128), jnp.float32)
    for li, lp in enumerate(params["layers"]):
        attn_w = attn_w.at[li, :, 0:HIDDEN].set(lp["wq"] * scale)        # scale folded
        attn_w = attn_w.at[li, :, HIDDEN:2 * HIDDEN].set(lp["wk"])
        attn_w = attn_w.at[li, :, 2 * HIDDEN:3 * HIDDEN].set(lp["wv"])
        attn_w = attn_w.at[li, :, 3 * HIDDEN:].set(lp["wo"])
    attn_w = attn_w.at[NUM_LAYERS, :, :VOCAB].set(params["fc_w"])
    attn_w = attn_w.astype(bf16)

    ffn_w = jnp.zeros((NUM_LAYERS, HIDDEN + FFN, FFN), jnp.float32)
    for li, lp in enumerate(params["layers"]):
        ffn_w = ffn_w.at[li, :HIDDEN, :FFN].set(lp["w1"])
        ffn_w = ffn_w.at[li, HIDDEN:, :HIDDEN].set(lp["w2"])
    ffn_w = ffn_w.astype(bf16)

    pos_type = (jnp.tile(params["pos_emb"], (BATCH, 1))
                + params["type_emb"][0][None, :]).astype(jnp.float32)    # [B*S, H]

    return {
        "const": const,
        "attn_w": attn_w,
        "ffn_w": ffn_w,
        "word_emb": params["word_emb"].astype(bf16),
        "pos_type": pos_type,
    }


# -------------------------------- forward pass -------------------------------
def bertsum_forward(packed, input_ids, attention_mask):
    B, S = input_ids.shape
    ids = input_ids.reshape(B * S, 1).astype(jnp.int32)
    mask = attention_mask.reshape(1, B * S).astype(jnp.float32)

    operands = (ids, mask, packed["word_emb"], packed["pos_type"],
                packed["const"], packed["attn_w"], packed["ffn_w"])

    logits_pad = pl.pallas_call(
        _bertsum_kernel,
        out_shape=jax.ShapeDtypeStruct((B * S, VOCAB_PAD), jnp.float32),
        in_specs=[_full_spec(x.shape) for x in operands],
        out_specs=_full_spec((B * S, VOCAB_PAD)),
    )(*operands)

    return logits_pad[:, :VOCAB].reshape(B, S, VOCAB)


# ------------------------------------ main -----------------------------------
if __name__ == "__main__":
    key = jax.random.PRNGKey(0)
    pkey, idkey = jax.random.split(key)

    params = init_params(pkey)
    packed = pack_params(params)      # one-time host/device packing, OUTSIDE jit

    input_ids = jax.random.randint(idkey, (BATCH, SEQ), 0, VOCAB, dtype=jnp.int32)
    attention_mask = jnp.ones((BATCH, SEQ), dtype=jnp.int32)
    attention_mask = attention_mask.at[1, SEQ - 2:].set(0)  # some padding in batch 1

    forward = jax.jit(bertsum_forward)
    logits = forward(packed, input_ids, attention_mask)
    logits = jax.block_until_ready(logits)

    assert logits.shape == (BATCH, SEQ, VOCAB)
    assert logits.dtype == jnp.float32
    assert bool(jnp.all(jnp.isfinite(logits)))
    print("KERNEL_OK")
</pallas_src>

<mosaic_0001>
module attributes {stable_mosaic.version = 11 : i64} {
  func.func @_bertsum_kernel(%arg0: memref<16x1xi32, #tpu.memory_space<vmem>>, %arg1: memref<1x16xf32, #tpu.memory_space<vmem>>, %arg2: memref<64x32xbf16, #tpu.memory_space<vmem>>, %arg3: memref<16x32xf32, #tpu.memory_space<vmem>>, %arg4: memref<19x128xf32, #tpu.memory_space<vmem>>, %arg5: memref<3x32x128xbf16, #tpu.memory_space<vmem>>, %arg6: memref<2x96x64xbf16, #tpu.memory_space<vmem>>, %arg7: memref<16x128xf32, #tpu.memory_space<vmem>>) attributes {dimension_semantics = [], scalar_prefetch = 0 : i64, scratch_operands = 0 : i64, tpu.core_type = #tpu.core_type<tc>} {
    %c0 = arith.constant 0 : index
    %c0_0 = arith.constant 0 : index
    %0 = vector.load %arg0[%c0, %c0_0] : memref<16x1xi32, #tpu.memory_space<vmem>>, vector<16x1xi32>
    %1 = tpu.iota {dimensions = array<i32: 1>} : vector<16x64xi32>
    %2 = vector.broadcast %0 : vector<16x1xi32> to vector<16x64xi32>
    %3 = arith.cmpi eq, %2, %1 : vector<16x64xi32>
    %cst = arith.constant 1.000000e+00 : f32
    %cst_1 = arith.constant 0.000000e+00 : f32
    %4 = vector.broadcast %cst : f32 to vector<16x64xf32>
    %5 = vector.broadcast %cst_1 : f32 to vector<16x64xf32>
    %6 = arith.select %3, %4, %5 : vector<16x64xi1>, vector<16x64xf32>
    %7 = arith.truncf %6 : vector<16x64xf32> to vector<16x64xbf16>
    %c0_2 = arith.constant 0 : index
    %c0_3 = arith.constant 0 : index
    %8 = vector.load %arg2[%c0_2, %c0_3] : memref<64x32xbf16, #tpu.memory_space<vmem>>, vector<64x32xbf16>
    %cst_4 = arith.constant dense<0.000000e+00> : vector<16x32xf32>
    %9 = tpu.matmul %7, %8, %cst_4 {dimension_numbers = #tpu.dot_dimension_numbers<[1], [0], [0], [1], [0, 0, 1, 1], [], []>} : vector<16x64xbf16>, vector<64x32xbf16>, vector<16x32xf32> -> vector<16x32xf32>
    %c0_5 = arith.constant 0 : index
    %c0_6 = arith.constant 0 : index
    %10 = vector.load %arg3[%c0_5, %c0_6] : memref<16x32xf32, #tpu.memory_space<vmem>>, vector<16x32xf32>
    %11 = arith.addf %9, %10 : vector<16x32xf32>
    %c0_7 = arith.constant 0 : index
    %c0_8 = arith.constant 0 : index
    %12 = vector.load %arg4[%c0_7, %c0_8] : memref<19x128xf32, #tpu.memory_space<vmem>>, vector<1x32xf32>
    %c1 = arith.constant 1 : index
    %c0_9 = arith.constant 0 : index
    %13 = vector.load %arg4[%c1, %c0_9] : memref<19x128xf32, #tpu.memory_space<vmem>>, vector<1x32xf32>
    %cst_10 = arith.constant dense<0.000000e+00> : vector<16xf32>
    %14 = vector.multi_reduction <add>, %11, %cst_10 [1] : vector<16x32xf32> to vector<16xf32>
    %15 = vector.shape_cast %14 : vector<16xf32> to vector<16x1xf32>
    %cst_11 = arith.constant 3.200000e+01 : f32
    %16 = vector.broadcast %cst_11 : f32 to vector<16x1xf32>
    %17 = arith.divf %15, %16 : vector<16x1xf32>
    %18 = vector.broadcast %17 : vector<16x1xf32> to vector<16x32xf32>
    %19 = arith.subf %11, %18 : vector<16x32xf32>
    %20 = vector.broadcast %17 : vector<16x1xf32> to vector<16x32xf32>
    %21 = arith.subf %11, %20 : vector<16x32xf32>
    %22 = arith.mulf %19, %21 : vector<16x32xf32>
    %cst_12 = arith.constant dense<0.000000e+00> : vector<16xf32>
    %23 = vector.multi_reduction <add>, %22, %cst_12 [1] : vector<16x32xf32> to vector<16xf32>
    %24 = vector.shape_cast %23 : vector<16xf32> to vector<16x1xf32>
    %cst_13 = arith.constant 3.200000e+01 : f32
    %25 = vector.broadcast %cst_13 : f32 to vector<16x1xf32>
    %26 = arith.divf %24, %25 : vector<16x1xf32>
    %27 = vector.broadcast %17 : vector<16x1xf32> to vector<16x32xf32>
    %28 = arith.subf %11, %27 : vector<16x32xf32>
    %cst_14 = arith.constant 9.99999996E-13 : f32
    %29 = vector.broadcast %cst_14 : f32 to vector<16x1xf32>
    %30 = arith.addf %26, %29 : vector<16x1xf32>
    %31 = math.rsqrt %30 : vector<16x1xf32>
    %32 = vector.broadcast %31 : vector<16x1xf32> to vector<16x32xf32>
    %33 = arith.mulf %28, %32 : vector<16x32xf32>
    %34 = vector.broadcast %12 : vector<1x32xf32> to vector<16x32xf32>
    %35 = arith.mulf %33, %34 : vector<16x32xf32>
    %36 = vector.broadcast %13 : vector<1x32xf32> to vector<16x32xf32>
    %37 = arith.addf %35, %36 : vector<16x32xf32>
    %38 = tpu.iota {dimensions = array<i32: 0>} : vector<16x16xi32>
    %39 = tpu.iota {dimensions = array<i32: 1>} : vector<16x16xi32>
    %c3_i32 = arith.constant 3 : i32
    %40 = vector.broadcast %c3_i32 : i32 to vector<16x16xi32>
    %41 = arith.shrui %38, %40 : vector<16x16xi32>
    %c3_i32_15 = arith.constant 3 : i32
    %42 = vector.broadcast %c3_i32_15 : i32 to vector<16x16xi32>
    %43 = arith.shrui %39, %42 : vector<16x16xi32>
    %44 = arith.cmpi eq, %41, %43 : vector<16x16xi32>
    %c0_16 = arith.constant 0 : index
    %c0_17 = arith.constant 0 : index
    %45 = vector.load %arg1[%c0_16, %c0_17] : memref<1x16xf32, #tpu.memory_space<vmem>>, vector<1x16xf32>
    %cst_18 = arith.constant 5.000000e-01 : f32
    %46 = vector.broadcast %cst_18 : f32 to vector<1x16xf32>
    %47 = arith.cmpf ogt, %45, %46 : vector<1x16xf32>
    %48 = vector.broadcast %47 : vector<1x16xi1> to vector<16x16xi1>
    %49 = arith.andi %44, %48 : vector<16x16xi1>
    %cst_19 = arith.constant 0.000000e+00 : f32
    %cst_20 = arith.constant -1.000000e+04 : f32
    %50 = vector.broadcast %cst_19 : f32 to vector<16x16xf32>
    %51 = vector.broadcast %cst_20 : f32 to vector<16x16xf32>
    %52 = arith.select %49, %50, %51 : vector<16x16xi1>, vector<16x16xf32>
    %c0_21 = arith.constant 0 : index
    %c0_22 = arith.constant 0 : index
    %c0_23 = arith.constant 0 : index
    %53 = vector.load %arg5[%c0_21, %c0_22, %c0_23] : memref<3x32x128xbf16, #tpu.memory_space<vmem>>, vector<1x32x128xbf16>
    %54 = vector.shape_cast %53 : vector<1x32x128xbf16> to vector<32x128xbf16>
    %55 = arith.truncf %37 : vector<16x32xf32> to vector<16x32xbf16>
    %56 = vector.extract_strided_slice %54 {offsets = [0, 0], sizes = [32, 96], strides = [1, 1]} : vector<32x128xbf16> to vector<32x96xbf16>
    %cst_24 = arith.constant dense<0.000000e+00> : vector<16x96xf32>
    %57 = tpu.matmul %55, %56, %cst_24 {dimension_numbers = #tpu.dot_dimension_numbers<[1], [0], [0], [1], [0, 0, 1, 1], [], []>} : vector<16x32xbf16>, vector<32x96xbf16>, vector<16x96xf32> -> vector<16x96xf32>
    %c2 = arith.constant 2 : index
    %c0_25 = arith.constant 0 : index
    %58 = vector.load %arg4[%c2, %c0_25] : memref<19x128xf32, #tpu.memory_space<vmem>>, vector<1x96xf32>
    %59 = vector.broadcast %58 : vector<1x96xf32> to vector<16x96xf32>
    %60 = arith.addf %57, %59 : vector<16x96xf32>
    %61 = vector.extract_strided_slice %60 {offsets = [0, 0], sizes = [16, 16], strides = [1, 1]} : vector<16x96xf32> to vector<16x16xf32>
    %62 = vector.extract_strided_slice %60 {offsets = [0, 32], sizes = [16, 16], strides = [1, 1]} : vector<16x96xf32> to vector<16x16xf32>
    %63 = vector.extract_strided_slice %60 {offsets = [0, 64], sizes = [16, 16], strides = [1, 1]} : vector<16x96xf32> to vector<16x16xf32>
    %64 = arith.truncf %61 : vector<16x16xf32> to vector<16x16xbf16>
    %65 = arith.truncf %62 : vector<16x16xf32> to vector<16x16xbf16>
    %cst_26 = arith.constant dense<0.000000e+00> : vector<16x16xf32>
    %66 = tpu.matmul %64, %65, %cst_26 {dimension_numbers = #tpu.dot_dimension_numbers<[1], [1], [0], [0], [0, 0, 1, 0], [], []>} : vector<16x16xbf16>, vector<16x16xbf16>, vector<16x16xf32> -> vector<16x16xf32>
    %67 = arith.addf %66, %52 : vector<16x16xf32>
    %cst_27 = arith.constant dense<0xFF800000> : vector<16xf32>
    %68 = vector.multi_reduction <maximumf>, %67, %cst_27 [1] : vector<16x16xf32> to vector<16xf32>
    %69 = vector.shape_cast %68 : vector<16xf32> to vector<16x1xf32>
    %70 = vector.broadcast %69 : vector<16x1xf32> to vector<16x16xf32>
    %71 = arith.subf %67, %70 : vector<16x16xf32>
    %72 = math.exp %71 : vector<16x16xf32>
    %cst_28 = arith.constant dense<0.000000e+00> : vector<16xf32>
    %73 = vector.multi_reduction <add>, %72, %cst_28 [1] : vector<16x16xf32> to vector<16xf32>
    %74 = vector.shape_cast %73 : vector<16xf32> to vector<16x1xf32>
    %75 = tpu.reciprocal %74 {approx = true} : vector<16x1xf32> -> vector<16x1xf32>
    %76 = vector.broadcast %75 : vector<16x1xf32> to vector<16x16xf32>
    %77 = arith.mulf %72, %76 : vector<16x16xf32>
    %78 = arith.truncf %77 : vector<16x16xf32> to vector<16x16xbf16>
    %79 = arith.truncf %63 : vector<16x16xf32> to vector<16x16xbf16>
    %cst_29 = arith.constant dense<0.000000e+00> : vector<16x16xf32>
    %80 = tpu.matmul %78, %79, %cst_29 {dimension_numbers = #tpu.dot_dimension_numbers<[1], [0], [0], [1], [0, 0, 1, 1], [], []>} : vector<16x16xbf16>, vector<16x16xbf16>, vector<16x16xf32> -> vector<16x16xf32>
    %81 = vector.extract_strided_slice %60 {offsets = [0, 16], sizes = [16, 16], strides = [1, 1]} : vector<16x96xf32> to vector<16x16xf32>
    %82 = vector.extract_strided_slice %60 {offsets = [0, 48], sizes = [16, 16], strides = [1, 1]} : vector<16x96xf32> to vector<16x16xf32>
    %83 = vector.extract_strided_slice %60 {offsets = [0, 80], sizes = [16, 16], strides = [1, 1]} : vector<16x96xf32> to vector<16x16xf32>
    %84 = arith.truncf %81 : vector<16x16xf32> to vector<16x16xbf16>
    %85 = arith.truncf %82 : vector<16x16xf32> to vector<16x16xbf16>
    %cst_30 = arith.constant dense<0.000000e+00> : vector<16x16xf32>
    %86 = tpu.matmul %84, %85, %cst_30 {dimension_numbers = #tpu.dot_dimension_numbers<[1], [1], [0], [0], [0, 0, 1, 0], [], []>} : vector<16x16xbf16>, vector<16x16xbf16>, vector<16x16xf32> -> vector<16x16xf32>
    %87 = arith.addf %86, %52 : vector<16x16xf32>
    %cst_31 = arith.constant dense<0xFF800000> : vector<16xf32>
    %88 = vector.multi_reduction <maximumf>, %87, %cst_31 [1] : vector<16x16xf32> to vector<16xf32>
    %89 = vector.shape_cast %88 : vector<16xf32> to vector<16x1xf32>
    %90 = vector.broadcast %89 : vector<16x1xf32> to vector<16x16xf32>
    %91 = arith.subf %87, %90 : vector<16x16xf32>
    %92 = math.exp %91 : vector<16x16xf32>
    %cst_32 = arith.constant dense<0.000000e+00> : vector<16xf32>
    %93 = vector.multi_reduction <add>, %92, %cst_32 [1] : vector<16x16xf32> to vector<16xf32>
    %94 = vector.shape_cast %93 : vector<16xf32> to vector<16x1xf32>
    %95 = tpu.reciprocal %94 {approx = true} : vector<16x1xf32> -> vector<16x1xf32>
    %96 = vector.broadcast %95 : vector<16x1xf32> to vector<16x16xf32>
    %97 = arith.mulf %92, %96 : vector<16x16xf32>
    %98 = arith.truncf %97 : vector<16x16xf32> to vector<16x16xbf16>
    %99 = arith.truncf %83 : vector<16x16xf32> to vector<16x16xbf16>
    %cst_33 = arith.constant dense<0.000000e+00> : vector<16x16xf32>
    %100 = tpu.matmul %98, %99, %cst_33 {dimension_numbers = #tpu.dot_dimension_numbers<[1], [0], [0], [1], [0, 0, 1, 1], [], []>} : vector<16x16xbf16>, vector<16x16xbf16>, vector<16x16xf32> -> vector<16x16xf32>
    %101 = tpu.concatenate %80, %100 in 1 : vector<16x16xf32>, vector<16x16xf32> -> vector<16x32xf32>
    %102 = arith.truncf %101 : vector<16x32xf32> to vector<16x32xbf16>
    %103 = vector.extract_strided_slice %54 {offsets = [0, 96], sizes = [32, 32], strides = [1, 1]} : vector<32x128xbf16> to vector<32x32xbf16>
    %cst_34 = arith.constant dense<0.000000e+00> : vector<16x32xf32>
    %104 = tpu.matmul %102, %103, %cst_34 {dimension_numbers = #tpu.dot_dimension_numbers<[1], [0], [0], [1], [0, 0, 1, 1], [], []>} : vector<16x32xbf16>, vector<32x32xbf16>, vector<16x32xf32> -> vector<16x32xf32>
    %c3 = arith.constant 3 : index
    %c0_35 = arith.constant 0 : index
    %105 = vector.load %arg4[%c3, %c0_35] : memref<19x128xf32, #tpu.memory_space<vmem>>, vector<1x32xf32>
    %106 = vector.broadcast %105 : vector<1x32xf32> to vector<16x32xf32>
    %107 = arith.addf %104, %106 : vector<16x32xf32>
    %108 = arith.addf %107, %37 : vector<16x32xf32>
    %c4 = arith.constant 4 : index
    %c0_36 = arith.constant 0 : index
    %109 = vector.load %arg4[%c4, %c0_36] : memref<19x128xf32, #tpu.memory_space<vmem>>, vector<1x32xf32>
    %c5 = arith.constant 5 : index
    %c0_37 = arith.constant 0 : index
    %110 = vector.load %arg4[%c5, %c0_37] : memref<19x128xf32, #tpu.memory_space<vmem>>, vector<1x32xf32>
    %cst_38 = arith.constant dense<0.000000e+00> : vector<16xf32>
    %111 = vector.multi_reduction <add>, %108, %cst_38 [1] : vector<16x32xf32> to vector<16xf32>
    %112 = vector.shape_cast %111 : vector<16xf32> to vector<16x1xf32>
    %cst_39 = arith.constant 3.200000e+01 : f32
    %113 = vector.broadcast %cst_39 : f32 to vector<16x1xf32>
    %114 = arith.divf %112, %113 : vector<16x1xf32>
    %115 = vector.broadcast %114 : vector<16x1xf32> to vector<16x32xf32>
    %116 = arith.subf %108, %115 : vector<16x32xf32>
    %117 = vector.broadcast %114 : vector<16x1xf32> to vector<16x32xf32>
    %118 = arith.subf %108, %117 : vector<16x32xf32>
    %119 = arith.mulf %116, %118 : vector<16x32xf32>
    %cst_40 = arith.constant dense<0.000000e+00> : vector<16xf32>
    %120 = vector.multi_reduction <add>, %119, %cst_40 [1] : vector<16x32xf32> to vector<16xf32>
    %121 = vector.shape_cast %120 : vector<16xf32> to vector<16x1xf32>
    %cst_41 = arith.constant 3.200000e+01 : f32
    %122 = vector.broadcast %cst_41 : f32 to vector<16x1xf32>
    %123 = arith.divf %121, %122 : vector<16x1xf32>
    %124 = vector.broadcast %114 : vector<16x1xf32> to vector<16x32xf32>
    %125 = arith.subf %108, %124 : vector<16x32xf32>
    %cst_42 = arith.constant 9.99999996E-13 : f32
    %126 = vector.broadcast %cst_42 : f32 to vector<16x1xf32>
    %127 = arith.addf %123, %126 : vector<16x1xf32>
    %128 = math.rsqrt %127 : vector<16x1xf32>
    %129 = vector.broadcast %128 : vector<16x1xf32> to vector<16x32xf32>
    %130 = arith.mulf %125, %129 : vector<16x32xf32>
    %131 = vector.broadcast %109 : vector<1x32xf32> to vector<16x32xf32>
    %132 = arith.mulf %130, %131 : vector<16x32xf32>
    %133 = vector.broadcast %110 : vector<1x32xf32> to vector<16x32xf32>
    %134 = arith.addf %132, %133 : vector<16x32xf32>
    %c0_43 = arith.constant 0 : index
    %c0_44 = arith.constant 0 : index
    %c0_45 = arith.constant 0 : index
    %135 = vector.load %arg6[%c0_43, %c0_44, %c0_45] : memref<2x96x64xbf16, #tpu.memory_space<vmem>>, vector<1x96x64xbf16>
    %136 = vector.shape_cast %135 : vector<1x96x64xbf16> to vector<96x64xbf16>
    %137 = vector.extract_strided_slice %136 {offsets = [0, 0], sizes = [32, 64], strides = [1, 1]} : vector<96x64xbf16> to vector<32x64xbf16>
    %138 = vector.extract_strided_slice %136 {offsets = [32, 0], sizes = [64, 32], strides = [1, 1]} : vector<96x64xbf16> to vector<64x32xbf16>
    %139 = arith.truncf %134 : vector<16x32xf32> to vector<16x32xbf16>
    %cst_46 = arith.constant dense<0.000000e+00> : vector<16x64xf32>
    %140 = tpu.matmul %139, %137, %cst_46 {dimension_numbers = #tpu.dot_dimension_numbers<[1], [0], [0], [1], [0, 0, 1, 1], [], []>} : vector<16x32xbf16>, vector<32x64xbf16>, vector<16x64xf32> -> vector<16x64xf32>
    %c6 = arith.constant 6 : index
    %c0_47 = arith.constant 0 : index
    %141 = vector.load %arg4[%c6, %c0_47] : memref<19x128xf32, #tpu.memory_space<vmem>>, vector<1x64xf32>
    %142 = vector.broadcast %141 : vector<1x64xf32> to vector<16x64xf32>
    %143 = arith.addf %140, %142 : vector<16x64xf32>
    %144 = arith.mulf %143, %143 : vector<16x64xf32>
    %145 = arith.mulf %143, %144 : vector<16x64xf32>
    %cst_48 = arith.constant 4.471500e-02 : f32
    %146 = vector.broadcast %cst_48 : f32 to vector<16x64xf32>
    %147 = arith.mulf %146, %145 : vector<16x64xf32>
    %148 = arith.addf %143, %147 : vector<16x64xf32>
    %cst_49 = arith.constant 0.797884583 : f32
    %149 = vector.broadcast %cst_49 : f32 to vector<16x64xf32>
    %150 = arith.mulf %149, %148 : vector<16x64xf32>
    %151 = math.tanh %150 : vector<16x64xf32>
    %cst_50 = arith.constant 1.000000e+00 : f32
    %152 = vector.broadcast %cst_50 : f32 to vector<16x64xf32>
    %153 = arith.addf %152, %151 : vector<16x64xf32>
    %cst_51 = arith.constant 5.000000e-01 : f32
    %154 = vector.broadcast %cst_51 : f32 to vector<16x64xf32>
    %155 = arith.mulf %154, %153 : vector<16x64xf32>
    %156 = arith.mulf %143, %155 : vector<16x64xf32>
    %157 = arith.truncf %156 : vector<16x64xf32> to vector<16x64xbf16>
    %cst_52 = arith.constant dense<0.000000e+00> : vector<16x32xf32>
    %158 = tpu.matmul %157, %138, %cst_52 {dimension_numbers = #tpu.dot_dimension_numbers<[1], [0], [0], [1], [0, 0, 1, 1], [], []>} : vector<16x64xbf16>, vector<64x32xbf16>, vector<16x32xf32> -> vector<16x32xf32>
    %c7 = arith.constant 7 : index
    %c0_53 = arith.constant 0 : index
    %159 = vector.load %arg4[%c7, %c0_53] : memref<19x128xf32, #tpu.memory_space<vmem>>, vector<1x32xf32>
    %160 = vector.broadcast %159 : vector<1x32xf32> to vector<16x32xf32>
    %161 = arith.addf %158, %160 : vector<16x32xf32>
    %162 = arith.addf %161, %134 : vector<16x32xf32>
    %c8 = arith.constant 8 : index
    %c0_54 = arith.constant 0 : index
    %163 = vector.load %arg4[%c8, %c0_54] : memref<19x128xf32, #tpu.memory_space<vmem>>, vector<1x32xf32>
    %c9 = arith.constant 9 : index
    %c0_55 = arith.constant 0 : index
    %164 = vector.load %arg4[%c9, %c0_55] : memref<19x128xf32, #tpu.memory_space<vmem>>, vector<1x32xf32>
    %cst_56 = arith.constant dense<0.000000e+00> : vector<16xf32>
    %165 = vector.multi_reduction <add>, %162, %cst_56 [1] : vector<16x32xf32> to vector<16xf32>
    %166 = vector.shape_cast %165 : vector<16xf32> to vector<16x1xf32>
    %cst_57 = arith.constant 3.200000e+01 : f32
    %167 = vector.broadcast %cst_57 : f32 to vector<16x1xf32>
    %168 = arith.divf %166, %167 : vector<16x1xf32>
    %169 = vector.broadcast %168 : vector<16x1xf32> to vector<16x32xf32>
    %170 = arith.subf %162, %169 : vector<16x32xf32>
    %171 = vector.broadcast %168 : vector<16x1xf32> to vector<16x32xf32>
    %172 = arith.subf %162, %171 : vector<16x32xf32>
    %173 = arith.mulf %170, %172 : vector<16x32xf32>
    %cst_58 = arith.constant dense<0.000000e+00> : vector<16xf32>
    %174 = vector.multi_reduction <add>, %173, %cst_58 [1] : vector<16x32xf32> to vector<16xf32>
    %175 = vector.shape_cast %174 : vector<16xf32> to vector<16x1xf32>
    %cst_59 = arith.constant 3.200000e+01 : f32
    %176 = vector.broadcast %cst_59 : f32 to vector<16x1xf32>
    %177 = arith.divf %175, %176 : vector<16x1xf32>
    %178 = vector.broadcast %168 : vector<16x1xf32> to vector<16x32xf32>
    %179 = arith.subf %162, %178 : vector<16x32xf32>
    %cst_60 = arith.constant 9.99999996E-13 : f32
    %180 = vector.broadcast %cst_60 : f32 to vector<16x1xf32>
    %181 = arith.addf %177, %180 : vector<16x1xf32>
    %182 = math.rsqrt %181 : vector<16x1xf32>
    %183 = vector.broadcast %182 : vector<16x1xf32> to vector<16x32xf32>
    %184 = arith.mulf %179, %183 : vector<16x32xf32>
    %185 = vector.broadcast %163 : vector<1x32xf32> to vector<16x32xf32>
    %186 = arith.mulf %184, %185 : vector<16x32xf32>
    %187 = vector.broadcast %164 : vector<1x32xf32> to vector<16x32xf32>
    %188 = arith.addf %186, %187 : vector<16x32xf32>
    %c1_61 = arith.constant 1 : index
    %c0_62 = arith.constant 0 : index
    %c0_63 = arith.constant 0 : index
    %189 = vector.load %arg5[%c1_61, %c0_62, %c0_63] : memref<3x32x128xbf16, #tpu.memory_space<vmem>>, vector<1x32x128xbf16>
    %190 = vector.shape_cast %189 : vector<1x32x128xbf16> to vector<32x128xbf16>
    %191 = arith.truncf %188 : vector<16x32xf32> to vector<16x32xbf16>
    %192 = vector.extract_strided_slice %190 {offsets = [0, 0], sizes = [32, 96], strides = [1, 1]} : vector<32x128xbf16> to vector<32x96xbf16>
    %cst_64 = arith.constant dense<0.000000e+00> : vector<16x96xf32>
    %193 = tpu.matmul %191, %192, %cst_64 {dimension_numbers = #tpu.dot_dimension_numbers<[1], [0], [0], [1], [0, 0, 1, 1], [], []>} : vector<16x32xbf16>, vector<32x96xbf16>, vector<16x96xf32> -> vector<16x96xf32>
    %c10 = arith.constant 10 : index
    %c0_65 = arith.constant 0 : index
    %194 = vector.load %arg4[%c10, %c0_65] : memref<19x128xf32, #tpu.memory_space<vmem>>, vector<1x96xf32>
    %195 = vector.broadcast %194 : vector<1x96xf32> to vector<16x96xf32>
    %196 = arith.addf %193, %195 : vector<16x96xf32>
    %197 = vector.extract_strided_slice %196 {offsets = [0, 0], sizes = [16, 16], strides = [1, 1]} : vector<16x96xf32> to vector<16x16xf32>
    %198 = vector.extract_strided_slice %196 {offsets = [0, 32], sizes = [16, 16], strides = [1, 1]} : vector<16x96xf32> to vector<16x16xf32>
    %199 = vector.extract_strided_slice %196 {offsets = [0, 64], sizes = [16, 16], strides = [1, 1]} : vector<16x96xf32> to vector<16x16xf32>
    %200 = arith.truncf %197 : vector<16x16xf32> to vector<16x16xbf16>
    %201 = arith.truncf %198 : vector<16x16xf32> to vector<16x16xbf16>
    %cst_66 = arith.constant dense<0.000000e+00> : vector<16x16xf32>
    %202 = tpu.matmul %200, %201, %cst_66 {dimension_numbers = #tpu.dot_dimension_numbers<[1], [1], [0], [0], [0, 0, 1, 0], [], []>} : vector<16x16xbf16>, vector<16x16xbf16>, vector<16x16xf32> -> vector<16x16xf32>
    %203 = arith.addf %202, %52 : vector<16x16xf32>
    %cst_67 = arith.constant dense<0xFF800000> : vector<16xf32>
    %204 = vector.multi_reduction <maximumf>, %203, %cst_67 [1] : vector<16x16xf32> to vector<16xf32>
    %205 = vector.shape_cast %204 : vector<16xf32> to vector<16x1xf32>
    %206 = vector.broadcast %205 : vector<16x1xf32> to vector<16x16xf32>
    %207 = arith.subf %203, %206 : vector<16x16xf32>
    %208 = math.exp %207 : vector<16x16xf32>
    %cst_68 = arith.constant dense<0.000000e+00> : vector<16xf32>
    %209 = vector.multi_reduction <add>, %208, %cst_68 [1] : vector<16x16xf32> to vector<16xf32>
    %210 = vector.shape_cast %209 : vector<16xf32> to vector<16x1xf32>
    %211 = tpu.reciprocal %210 {approx = true} : vector<16x1xf32> -> vector<16x1xf32>
    %212 = vector.broadcast %211 : vector<16x1xf32> to vector<16x16xf32>
    %213 = arith.mulf %208, %212 : vector<16x16xf32>
    %214 = arith.truncf %213 : vector<16x16xf32> to vector<16x16xbf16>
    %215 = arith.truncf %199 : vector<16x16xf32> to vector<16x16xbf16>
    %cst_69 = arith.constant dense<0.000000e+00> : vector<16x16xf32>
    %216 = tpu.matmul %214, %215, %cst_69 {dimension_numbers = #tpu.dot_dimension_numbers<[1], [0], [0], [1], [0, 0, 1, 1], [], []>} : vector<16x16xbf16>, vector<16x16xbf16>, vector<16x16xf32> -> vector<16x16xf32>
    %217 = vector.extract_strided_slice %196 {offsets = [0, 16], sizes = [16, 16], strides = [1, 1]} : vector<16x96xf32> to vector<16x16xf32>
    %218 = vector.extract_strided_slice %196 {offsets = [0, 48], sizes = [16, 16], strides = [1, 1]} : vector<16x96xf32> to vector<16x16xf32>
    %219 = vector.extract_strided_slice %196 {offsets = [0, 80], sizes = [16, 16], strides = [1, 1]} : vector<16x96xf32> to vector<16x16xf32>
    %220 = arith.truncf %217 : vector<16x16xf32> to vector<16x16xbf16>
    %221 = arith.truncf %218 : vector<16x16xf32> to vector<16x16xbf16>
    %cst_70 = arith.constant dense<0.000000e+00> : vector<16x16xf32>
    %222 = tpu.matmul %220, %221, %cst_70 {dimension_numbers = #tpu.dot_dimension_numbers<[1], [1], [0], [0], [0, 0, 1, 0], [], []>} : vector<16x16xbf16>, vector<16x16xbf16>, vector<16x16xf32> -> vector<16x16xf32>
    %223 = arith.addf %222, %52 : vector<16x16xf32>
    %cst_71 = arith.constant dense<0xFF800000> : vector<16xf32>
    %224 = vector.multi_reduction <maximumf>, %223, %cst_71 [1] : vector<16x16xf32> to vector<16xf32>
    %225 = vector.shape_cast %224 : vector<16xf32> to vector<16x1xf32>
    %226 = vector.broadcast %225 : vector<16x1xf32> to vector<16x16xf32>
    %227 = arith.subf %223, %226 : vector<16x16xf32>
    %228 = math.exp %227 : vector<16x16xf32>
    %cst_72 = arith.constant dense<0.000000e+00> : vector<16xf32>
    %229 = vector.multi_reduction <add>, %228, %cst_72 [1] : vector<16x16xf32> to vector<16xf32>
    %230 = vector.shape_cast %229 : vector<16xf32> to vector<16x1xf32>
    %231 = tpu.reciprocal %230 {approx = true} : vector<16x1xf32> -> vector<16x1xf32>
    %232 = vector.broadcast %231 : vector<16x1xf32> to vector<16x16xf32>
    %233 = arith.mulf %228, %232 : vector<16x16xf32>
    %234 = arith.truncf %233 : vector<16x16xf32> to vector<16x16xbf16>
    %235 = arith.truncf %219 : vector<16x16xf32> to vector<16x16xbf16>
    %cst_73 = arith.constant dense<0.000000e+00> : vector<16x16xf32>
    %236 = tpu.matmul %234, %235, %cst_73 {dimension_numbers = #tpu.dot_dimension_numbers<[1], [0], [0], [1], [0, 0, 1, 1], [], []>} : vector<16x16xbf16>, vector<16x16xbf16>, vector<16x16xf32> -> vector<16x16xf32>
    %237 = tpu.concatenate %216, %236 in 1 : vector<16x16xf32>, vector<16x16xf32> -> vector<16x32xf32>
    %238 = arith.truncf %237 : vector<16x32xf32> to vector<16x32xbf16>
    %239 = vector.extract_strided_slice %190 {offsets = [0, 96], sizes = [32, 32], strides = [1, 1]} : vector<32x128xbf16> to vector<32x32xbf16>
    %cst_74 = arith.constant dense<0.000000e+00> : vector<16x32xf32>
    %240 = tpu.matmul %238, %239, %cst_74 {dimension_numbers = #tpu.dot_dimension_numbers<[1], [0], [0], [1], [0, 0, 1, 1], [], []>} : vector<16x32xbf16>, vector<32x32xbf16>, vector<16x32xf32> -> vector<16x32xf32>
    %c11 = arith.constant 11 : index
    %c0_75 = arith.constant 0 : index
    %241 = vector.load %arg4[%c11, %c0_75] : memref<19x128xf32, #tpu.memory_space<vmem>>, vector<1x32xf32>
    %242 = vector.broadcast %241 : vector<1x32xf32> to vector<16x32xf32>
    %243 = arith.addf %240, %242 : vector<16x32xf32>
    %244 = arith.addf %243, %188 : vector<16x32xf32>
    %c12 = arith.constant 12 : index
    %c0_76 = arith.constant 0 : index
    %245 = vector.load %arg4[%c12, %c0_76] : memref<19x128xf32, #tpu.memory_space<vmem>>, vector<1x32xf32>
    %c13 = arith.constant 13 : index
    %c0_77 = arith.constant 0 : index
    %246 = vector.load %arg4[%c13, %c0_77] : memref<19x128xf32, #tpu.memory_space<vmem>>, vector<1x32xf32>
    %cst_78 = arith.constant dense<0.000000e+00> : vector<16xf32>
    %247 = vector.multi_reduction <add>, %244, %cst_78 [1] : vector<16x32xf32> to vector<16xf32>
    %248 = vector.shape_cast %247 : vector<16xf32> to vector<16x1xf32>
    %cst_79 = arith.constant 3.200000e+01 : f32
    %249 = vector.broadcast %cst_79 : f32 to vector<16x1xf32>
    %250 = arith.divf %248, %249 : vector<16x1xf32>
    %251 = vector.broadcast %250 : vector<16x1xf32> to vector<16x32xf32>
    %252 = arith.subf %244, %251 : vector<16x32xf32>
    %253 = vector.broadcast %250 : vector<16x1xf32> to vector<16x32xf32>
    %254 = arith.subf %244, %253 : vector<16x32xf32>
    %255 = arith.mulf %252, %254 : vector<16x32xf32>
    %cst_80 = arith.constant dense<0.000000e+00> : vector<16xf32>
    %256 = vector.multi_reduction <add>, %255, %cst_80 [1] : vector<16x32xf32> to vector<16xf32>
    %257 = vector.shape_cast %256 : vector<16xf32> to vector<16x1xf32>
    %cst_81 = arith.constant 3.200000e+01 : f32
    %258 = vector.broadcast %cst_81 : f32 to vector<16x1xf32>
    %259 = arith.divf %257, %258 : vector<16x1xf32>
    %260 = vector.broadcast %250 : vector<16x1xf32> to vector<16x32xf32>
    %261 = arith.subf %244, %260 : vector<16x32xf32>
    %cst_82 = arith.constant 9.99999996E-13 : f32
    %262 = vector.broadcast %cst_82 : f32 to vector<16x1xf32>
    %263 = arith.addf %259, %262 : vector<16x1xf32>
    %264 = math.rsqrt %263 : vector<16x1xf32>
    %265 = vector.broadcast %264 : vector<16x1xf32> to vector<16x32xf32>
    %266 = arith.mulf %261, %265 : vector<16x32xf32>
    %267 = vector.broadcast %245 : vector<1x32xf32> to vector<16x32xf32>
    %268 = arith.mulf %266, %267 : vector<16x32xf32>
    %269 = vector.broadcast %246 : vector<1x32xf32> to vector<16x32xf32>
    %270 = arith.addf %268, %269 : vector<16x32xf32>
    %c1_83 = arith.constant 1 : index
    %c0_84 = arith.constant 0 : index
    %c0_85 = arith.constant 0 : index
    %271 = vector.load %arg6[%c1_83, %c0_84, %c0_85] : memref<2x96x64xbf16, #tpu.memory_space<vmem>>, vector<1x96x64xbf16>
    %272 = vector.shape_cast %271 : vector<1x96x64xbf16> to vector<96x64xbf16>
    %273 = vector.extract_strided_slice %272 {offsets = [0, 0], sizes = [32, 64], strides = [1, 1]} : vector<96x64xbf16> to vector<32x64xbf16>
    %274 = vector.extract_strided_slice %272 {offsets = [32, 0], sizes = [64, 32], strides = [1, 1]} : vector<96x64xbf16> to vector<64x32xbf16>
    %275 = arith.truncf %270 : vector<16x32xf32> to vector<16x32xbf16>
    %cst_86 = arith.constant dense<0.000000e+00> : vector<16x64xf32>
    %276 = tpu.matmul %275, %273, %cst_86 {dimension_numbers = #tpu.dot_dimension_numbers<[1], [0], [0], [1], [0, 0, 1, 1], [], []>} : vector<16x32xbf16>, vector<32x64xbf16>, vector<16x64xf32> -> vector<16x64xf32>
    %c14 = arith.constant 14 : index
    %c0_87 = arith.constant 0 : index
    %277 = vector.load %arg4[%c14, %c0_87] : memref<19x128xf32, #tpu.memory_space<vmem>>, vector<1x64xf32>
    %278 = vector.broadcast %277 : vector<1x64xf32> to vector<16x64xf32>
    %279 = arith.addf %276, %278 : vector<16x64xf32>
    %280 = arith.mulf %279, %279 : vector<16x64xf32>
    %281 = arith.mulf %279, %280 : vector<16x64xf32>
    %cst_88 = arith.constant 4.471500e-02 : f32
    %282 = vector.broadcast %cst_88 : f32 to vector<16x64xf32>
    %283 = arith.mulf %282, %281 : vector<16x64xf32>
    %284 = arith.addf %279, %283 : vector<16x64xf32>
    %cst_89 = arith.constant 0.797884583 : f32
    %285 = vector.broadcast %cst_89 : f32 to vector<16x64xf32>
    %286 = arith.mulf %285, %284 : vector<16x64xf32>
    %287 = math.tanh %286 : vector<16x64xf32>
    %cst_90 = arith.constant 1.000000e+00 : f32
    %288 = vector.broadcast %cst_90 : f32 to vector<16x64xf32>
    %289 = arith.addf %288, %287 : vector<16x64xf32>
    %cst_91 = arith.constant 5.000000e-01 : f32
    %290 = vector.broadcast %cst_91 : f32 to vector<16x64xf32>
    %291 = arith.mulf %290, %289 : vector<16x64xf32>
    %292 = arith.mulf %279, %291 : vector<16x64xf32>
    %293 = arith.truncf %292 : vector<16x64xf32> to vector<16x64xbf16>
    %cst_92 = arith.constant dense<0.000000e+00> : vector<16x32xf32>
    %294 = tpu.matmul %293, %274, %cst_92 {dimension_numbers = #tpu.dot_dimension_numbers<[1], [0], [0], [1], [0, 0, 1, 1], [], []>} : vector<16x64xbf16>, vector<64x32xbf16>, vector<16x32xf32> -> vector<16x32xf32>
    %c15 = arith.constant 15 : index
    %c0_93 = arith.constant 0 : index
    %295 = vector.load %arg4[%c15, %c0_93] : memref<19x128xf32, #tpu.memory_space<vmem>>, vector<1x32xf32>
    %296 = vector.broadcast %295 : vector<1x32xf32> to vector<16x32xf32>
    %297 = arith.addf %294, %296 : vector<16x32xf32>
    %298 = arith.addf %297, %270 : vector<16x32xf32>
    %c16 = arith.constant 16 : index
    %c0_94 = arith.constant 0 : index
    %299 = vector.load %arg4[%c16, %c0_94] : memref<19x128xf32, #tpu.memory_space<vmem>>, vector<1x32xf32>
    %c17 = arith.constant 17 : index
    %c0_95 = arith.constant 0 : index
    %300 = vector.load %arg4[%c17, %c0_95] : memref<19x128xf32, #tpu.memory_space<vmem>>, vector<1x32xf32>
    %cst_96 = arith.constant dense<0.000000e+00> : vector<16xf32>
    %301 = vector.multi_reduction <add>, %298, %cst_96 [1] : vector<16x32xf32> to vector<16xf32>
    %302 = vector.shape_cast %301 : vector<16xf32> to vector<16x1xf32>
    %cst_97 = arith.constant 3.200000e+01 : f32
    %303 = vector.broadcast %cst_97 : f32 to vector<16x1xf32>
    %304 = arith.divf %302, %303 : vector<16x1xf32>
    %305 = vector.broadcast %304 : vector<16x1xf32> to vector<16x32xf32>
    %306 = arith.subf %298, %305 : vector<16x32xf32>
    %307 = vector.broadcast %304 : vector<16x1xf32> to vector<16x32xf32>
    %308 = arith.subf %298, %307 : vector<16x32xf32>
    %309 = arith.mulf %306, %308 : vector<16x32xf32>
    %cst_98 = arith.constant dense<0.000000e+00> : vector<16xf32>
    %310 = vector.multi_reduction <add>, %309, %cst_98 [1] : vector<16x32xf32> to vector<16xf32>
    %311 = vector.shape_cast %310 : vector<16xf32> to vector<16x1xf32>
    %cst_99 = arith.constant 3.200000e+01 : f32
    %312 = vector.broadcast %cst_99 : f32 to vector<16x1xf32>
    %313 = arith.divf %311, %312 : vector<16x1xf32>
    %314 = vector.broadcast %304 : vector<16x1xf32> to vector<16x32xf32>
    %315 = arith.subf %298, %314 : vector<16x32xf32>
    %cst_100 = arith.constant 9.99999996E-13 : f32
    %316 = vector.broadcast %cst_100 : f32 to vector<16x1xf32>
    %317 = arith.addf %313, %316 : vector<16x1xf32>
    %318 = math.rsqrt %317 : vector<16x1xf32>
    %319 = vector.broadcast %318 : vector<16x1xf32> to vector<16x32xf32>
    %320 = arith.mulf %315, %319 : vector<16x32xf32>
    %321 = vector.broadcast %299 : vector<1x32xf32> to vector<16x32xf32>
    %322 = arith.mulf %320, %321 : vector<16x32xf32>
    %323 = vector.broadcast %300 : vector<1x32xf32> to vector<16x32xf32>
    %324 = arith.addf %322, %323 : vector<16x32xf32>
    %325 = arith.truncf %324 : vector<16x32xf32> to vector<16x32xbf16>
    %c2_101 = arith.constant 2 : index
    %c0_102 = arith.constant 0 : index
    %c0_103 = arith.constant 0 : index
    %326 = vector.load %arg5[%c2_101, %c0_102, %c0_103] : memref<3x32x128xbf16, #tpu.memory_space<vmem>>, vector<1x32x128xbf16>
    %327 = vector.shape_cast %326 : vector<1x32x128xbf16> to vector<32x128xbf16>
    %cst_104 = arith.constant dense<0.000000e+00> : vector<16x128xf32>
    %328 = tpu.matmul %325, %327, %cst_104 {dimension_numbers = #tpu.dot_dimension_numbers<[1], [0], [0], [1], [0, 0, 1, 1], [], []>} : vector<16x32xbf16>, vector<32x128xbf16>, vector<16x128xf32> -> vector<16x128xf32>
    %c18 = arith.constant 18 : index
    %c0_105 = arith.constant 0 : index
    %329 = vector.load %arg4[%c18, %c0_105] : memref<19x128xf32, #tpu.memory_space<vmem>>, vector<1x128xf32>
    %330 = vector.broadcast %329 : vector<1x128xf32> to vector<16x128xf32>
    %331 = arith.addf %328, %330 : vector<16x128xf32>
    %c0_106 = arith.constant 0 : index
    %c0_107 = arith.constant 0 : index
    %332 = vector.load %arg7[%c0_106, %c0_107] : memref<16x128xf32, #tpu.memory_space<vmem>>, vector<16x128xf32>
    tpu.vector_store %arg7[%c0_106, %c0_107], %331 {strides = array<i32>} : memref<16x128xf32, #tpu.memory_space<vmem>>, vector<16x128xf32>,
    return
  }
}

</mosaic_0001>

<llo_original>
// kernel: bertsum_forward.1
$region0: #{bertsum_forward.1}
  #allocation0 [shape = 'u32[]', space=smem, size = 0x4, offset = 0x4, fixed_abs, tag = 'smem constant byte address 0x4 - core index']
  #allocation1 [shape = 'u32[144,128]{1,0:T(1,128)}', space=vmem, size = 0x12000, scoped, tag = 'internal scratch']
  %s0 = inlined_call_operand.vmem [shape: s32[16,1], index: 0, kind: input, shape index: {}]
  %s1 = inlined_call_operand.vmem [shape: f32[1,16], index: 1, kind: input, shape index: {}]
  %s2 = inlined_call_operand.vmem [shape: bf16[64,32], index: 2, kind: input, shape index: {}]
  %s3 = inlined_call_operand.vmem [shape: f32[16,32], index: 3, kind: input, shape index: {}]
  %s4 = inlined_call_operand.vmem [shape: f32[19,128], index: 4, kind: input, shape index: {}]
  %s5 = inlined_call_operand.vmem [shape: bf16[3,32,128], index: 5, kind: input, shape index: {}]
  %s6 = inlined_call_operand.vmem [shape: bf16[2,96,64], index: 6, kind: input, shape index: {}]
  %s7 = inlined_call_operand.vmem [shape: f32[16,128], index: 7, kind: output, shape index: {}]
  %s8 = sld [smem:[#allocation0]]
  $region38: #{bertsum_forward.1} parent=0
    _
  %s10 = ssub.s32 1, %s8
  %s11 = scalar_select 0, %s10, %s8
  // Predicated region
  $region2: #{bertsum_forward.1} parent=0 // pred_check
    _
  $region3: #{bertsum_forward.1} parent=0 // pred_check_branch
    %13 = sbr.rel (0) target = $region5
  $region4: #{bertsum_forward.1} parent=0 // pred_region
    _
  $region5: #{bertsum_forward.1} parent=0 // pred_fallthru
    _
  // Predicated region
  $region6: #{bertsum_forward.1} parent=0 // pred_check
    _
  $region7: #{bertsum_forward.1} parent=0 // pred_check_branch
    %15 = sbr.rel (0) target = $region9
  $region8: #{bertsum_forward.1} parent=0 // pred_region
    _
  $region9: #{bertsum_forward.1} parent=0 // pred_fallthru
    _
  // Predicated region
  $region10: #{bertsum_forward.1} parent=0 // pred_check
    _
  $region11: #{bertsum_forward.1} parent=0 // pred_check_branch
    %17 = sbr.rel (0) target = $region13
  $region12: #{bertsum_forward.1} parent=0 // pred_region
    _
  $region13: #{bertsum_forward.1} parent=0 // pred_fallthru
    _
  // Predicated region
  $region14: #{bertsum_forward.1} parent=0 // pred_check
    _
  $region15: #{bertsum_forward.1} parent=0 // pred_check_branch
    %19 = sbr.rel (0) target = $region17
  $region16: #{bertsum_forward.1} parent=0 // pred_region
    _
  $region17: #{bertsum_forward.1} parent=0 // pred_fallthru
    _
  // Predicated region
  $region18: #{bertsum_forward.1} parent=0 // pred_check
    _
  $region19: #{bertsum_forward.1} parent=0 // pred_check_branch
    %21 = sbr.rel (0) target = $region21
  $region20: #{bertsum_forward.1} parent=0 // pred_region
    _
  $region21: #{bertsum_forward.1} parent=0 // pred_fallthru
    _
  // Predicated region
  $region22: #{bertsum_forward.1} parent=0 // pred_check
    _
  $region23: #{bertsum_forward.1} parent=0 // pred_check_branch
    %23 = sbr.rel (0) target = $region25
  $region24: #{bertsum_forward.1} parent=0 // pred_region
    _
  $region25: #{bertsum_forward.1} parent=0 // pred_fallthru
    _
  // Predicated region
  $region26: #{bertsum_forward.1} parent=0 // pred_check
    _
  $region27: #{bertsum_forward.1} parent=0 // pred_check_branch
    %25 = sbr.rel (0) target = $region29
  $region28: #{bertsum_forward.1} parent=0 // pred_region
    _
  $region29: #{bertsum_forward.1} parent=0 // pred_fallthru
    _
  %v27 = vld [vmem:[%s0] sm:$0xff]
  %v28 = vld [vmem:[%s0 + $0x8] sm:$0xff]
  %v29 = vlaneseq
  %v30 = vand.u32 %v29, 127
  %31 = vset.pattern.permute.xlu0 0
  %32 = vperm.xlu0 %31, %v27
  %v33 = vpop.permute.xlu0 %32
  %34 = vset.pattern.permute.xlu0 0
  %35 = vperm.xlu0 %34, %v28
  %v36 = vpop.permute.xlu0 %35
  %vm37 = vcmp.eq.s32.totalorder %v33, %v30
  %vm38 = vcmp.eq.s32.totalorder %v36, %v30
  %v39 = vsel %vm37, 1.0, 0.0
  %v40 = vsel %vm38, 1.0, 0.0
  %v41 = vpack.c.bf16 %v40, %v39
  %v42 = vld [vmem:[%s2] sm:$0xf]
  %v43 = vld [vmem:[%s2 + $0x4] sm:$0xf]
  %v44 = vld [vmem:[%s2 + $0x8] sm:$0xf]
  %v45 = vld [vmem:[%s2 + $0xc] sm:$0xf]
  %v46 = vld [vmem:[%s2 + $0x10] sm:$0xf]
  %v47 = vld [vmem:[%s2 + $0x14] sm:$0xf]
  %v48 = vld [vmem:[%s2 + $0x18] sm:$0xf]
  %v49 = vld [vmem:[%s2 + $0x1c] sm:$0xf]
  %v50 = vld [vmem:[%s3] sm:$0xff]
  %v51 = vld [vmem:[%s3 + $0x8] sm:$0xff]
  %v60 = vunpack.c.l.b16 %v42
  %v61 = vunpack.c.l.b16 %v43
  %v62 = vunpack.c.l.b16 %v44
  %v63 = vunpack.c.l.b16 %v45
  %v64 = vunpack.c.l.b16 %v46
  %v65 = vunpack.c.l.b16 %v47
  %v66 = vunpack.c.l.b16 %v48
  %v67 = vunpack.c.l.b16 %v49
  %v68 = vpack.c.b16 %v61, %v60
  %v69 = vpack.c.b16 %v63, %v62
  %v70 = vpack.c.b16 %v65, %v64
  %v71 = vpack.c.b16 %v67, %v66
  %vm76 = vcmask 523264
  %v78 = vsel %vm76, %v41, 0
  %80 = vmatprep.subr.bf16.mxu0 0
  %81 = vmatpush1.bf16.msra.mxu0 %v68
  %82 = vmatprep.subr.bf16.mxu0 0
  %83 = vmatpush1.bf16.msra.mxu0 %v69
  %84 = vmatprep.subr.bf16.mxu0 0
  %85 = vmatpush1.bf16.msra.mxu0 %v70
  %86 = vmatprep.subr.bf16.mxu0 0
  %87 = vmatpush1.bf16.msra.mxu0 %v71
  %88 = vmatprep.subr.bf16.mxu0 0
  %89 = vmatpush1.bf16.msra.mxu0 0
  %90 = vmatprep.subr.bf16.mxu0 0
  %91 = vmatpush1.bf16.msra.mxu0 0
  %92 = vmatprep.subr.bf16.mxu0 0
  %93 = vmatpush1.bf16.msra.mxu0 0
  %94 = vmatprep.subr.bf16.mxu0 0
  %95 = vmatpush1.bf16.msra.mxu0 0
  %96 = vmatprep.subr.bf16.mxu0 0
  %97 = vmatpush1.bf16.msra.mxu0 0
  %98 = vmatprep.subr.bf16.mxu0 0
  %99 = vmatpush1.bf16.msra.mxu0 0
  %100 = vmatprep.subr.bf16.mxu0 0
  %101 = vmatpush1.bf16.msra.mxu0 0
  %102 = vmatprep.subr.bf16.mxu0 0
  %103 = vmatpush1.bf16.msra.mxu0 0
  %104 = vmatprep.subr.bf16.mxu0 0
  %105 = vmatpush1.bf16.msra.mxu0 0
  %106 = vmatprep.subr.bf16.mxu0 0
  %107 = vmatpush1.bf16.msra.mxu0 0
  %108 = vmatprep.subr.bf16.mxu0 0
  %109 = vmatpush1.bf16.msra.mxu0 0
  %110 = vmatprep.subr.bf16.mxu0 0
  %111 = vmatpush1.bf16.msra.mxu0 0
  %112 = vmatprep.mubr.bf16.mxu0 0
  %113 = vmatmul.mubr.bf16.gmra.mrb[0].mxu0 %v78
  %v114 = vpop.f32.mrb[0].mxu0
  %v115 = vadd.f32 %v50, %v114
  %v116 = vpop.f32.mrb[0].mxu0
  %v117 = vpop.f32.mrb[0].mxu0
  %v118 = vadd.f32 %v51, %v117
  %v119 = vpop.f32.mrb[0].mxu0
  %120 = vdwg.mxu0
  %v121 = vld [vmem:[%s4] sm:$0x1]
  %v122 = vld [vmem:[%s4 + $0x1] sm:$0x1]
  %vm123 = vcmask 261120
  %v124 = vsel %vm123, %v115, 0.0
  %125 = vadd.xlane.f32.xlu0 %v124
  %v126 = vpop.xlane.xlu0 %125
  %v127 = vsel %vm123, %v118, 0.0
  %128 = vadd.xlane.f32.xlu0 %v127
  %v129 = vpop.xlane.xlu0 %128
  %v130 = vrcp.pop 32.0
  %v131 = vmul.f32 %v126, %v130
  %v132 = vmul.f32 %v129, %v130
  %v133 = vsub.f32 %v115, %v131
  %v134 = vsub.f32 %v118, %v132
  %v135 = vmul.f32 %v133, %v133
  %v136 = vmul.f32 %v134, %v134
  %v137 = vsel %vm123, %v135, 0.0
  %138 = vadd.xlane.f32.xlu0 %v137
  %v139 = vpop.xlane.xlu0 %138
  %v140 = vsel %vm123, %v136, 0.0
  %141 = vadd.xlane.f32.xlu0 %v140
  %v142 = vpop.xlane.xlu0 %141
  %v143 = vmul.f32 %v139, %v130
  %v144 = vmul.f32 %v142, %v130
  %v145 = vadd.f32 %v143, 1e-12
  %v146 = vadd.f32 %v144, 1e-12
  %v147 = vrsqrt.pop %v145
  %v148 = vrsqrt.pop %v146
  %v149 = vmul.f32 %v133, %v147
  %v150 = vmul.f32 %v134, %v148
  %v151 = vlaneseq
  %v152 = vshrl.u32 %v151, 7
  %v153 = vsub.s32 0, %v152
  %v154 = vrot.slane %v121, %v153
  %v155 = vmul.f32 %v149, %v154
  %v156 = vmul.f32 %v150, %v154
  %v157 = vlaneseq
  %v158 = vshrl.u32 %v157, 7
  %v159 = vsub.s32 0, %v158
  %v160 = vrot.slane %v122, %v159
  %v161 = vadd.f32 %v155, %v160
  %v162 = vadd.f32 %v156, %v160
  %v163 = vlaneseq
  %v164 = vshrl.u32 %v163, 7
  %v165 = vadd.s32 %v164, 8
  %v166 = vshrl.u32 %v164, 3
  %v167 = vshrl.u32 %v165, 3
  %v168 = vshrl.u32 %v30, 3
  %vm169 = vcmp.eq.s32.totalorder %v166, %v168
  %vm170 = vcmp.eq.s32.totalorder %v167, %v168
  %v171 = vld [vmem:[%s1] sm:$0x1]
  %vm172 = vcmp.gt.f32.partialorder %v171, 0.5
  %v173 = vsel %vm172, 1, 0
  %v174 = vlaneseq
  %v175 = vshrl.u32 %v174, 7
  %v176 = vsub.s32 0, %v175
  %v177 = vrot.slane %v173, %v176
  %vm178 = vcmp.eq.s32.totalorder %v177, 1
  %vm179 = vmand %vm169, %vm178
  %vm180 = vmand %vm170, %vm178
  %v181 = vsel %vm179, 0.0, -10000.0
  %v182 = vsel %vm180, 0.0, -10000.0
  %v183 = vld [vmem:[%s5] sm:$0xf]
  %v184 = vld [vmem:[%s5 + $0x4] sm:$0xf]
  %v185 = vld [vmem:[%s5 + $0x8] sm:$0xf]
  %v186 = vld [vmem:[%s5 + $0xc] sm:$0xf]
  %v187 = vpack.c.bf16 %v162, %v161
  %v188 = vld [vmem:[%s4 + $0x2] sm:$0x1]
  %v189 = vlaneseq
  %v190 = vshrl.u32 %v189, 7
  %v191 = vsub.s32 0, %v190
  %v192 = vrot.slane %v188, %v191
  %v197 = vunpack.c.l.b16 %v183
  %v198 = vunpack.c.l.b16 %v184
  %v199 = vunpack.c.l.b16 %v185
  %v200 = vunpack.c.l.b16 %v186
  %v201 = vpack.c.b16 %v198, %v197
  %v202 = vpack.c.b16 %v200, %v199
  %v206 = vsel %vm123, %v187, 0
  %208 = vmatprep.subr.bf16.mxu0 0
  %209 = vmatpush1.bf16.msra.mxu0 %v201
  %210 = vmatprep.subr.bf16.mxu0 0
  %211 = vmatpush1.bf16.msra.mxu0 %v202
  %212 = vmatprep.subr.bf16.mxu0 0
  %213 = vmatpush1.bf16.msra.mxu0 0
  %214 = vmatprep.subr.bf16.mxu0 0
  %215 = vmatpush1.bf16.msra.mxu0 0
  %216 = vmatprep.subr.bf16.mxu0 0
  %217 = vmatpush1.bf16.msra.mxu0 0
  %218 = vmatprep.subr.bf16.mxu0 0
  %219 = vmatpush1.bf16.msra.mxu0 0
  %220 = vmatprep.subr.bf16.mxu0 0
  %221 = vmatpush1.bf16.msra.mxu0 0
  %222 = vmatprep.subr.bf16.mxu0 0
  %223 = vmatpush1.bf16.msra.mxu0 0
  %224 = vmatprep.subr.bf16.mxu0 0
  %225 = vmatpush1.bf16.msra.mxu0 0
  %226 = vmatprep.subr.bf16.mxu0 0
  %227 = vmatpush1.bf16.msra.mxu0 0
  %228 = vmatprep.subr.bf16.mxu0 0
  %229 = vmatpush1.bf16.msra.mxu0 0
  %230 = vmatprep.subr.bf16.mxu0 0
  %231 = vmatpush1.bf16.msra.mxu0 0
  %232 = vmatprep.subr.bf16.mxu0 0
  %233 = vmatpush1.bf16.msra.mxu0 0
  %234 = vmatprep.subr.bf16.mxu0 0
  %235 = vmatpush1.bf16.msra.mxu0 0
  %236 = vmatprep.subr.bf16.mxu0 0
  %237 = vmatpush1.bf16.msra.mxu0 0
  %238 = vmatprep.subr.bf16.mxu0 0
  %239 = vmatpush1.bf16.msra.mxu0 0
  %240 = vmatprep.mubr.bf16.mxu0 0
  %241 = vmatmul.mubr.bf16.gmra.mrb[0].mxu0 %v206
  %v242 = vpop.f32.mrb[0].mxu0
  %v243 = vadd.f32 %v192, %v242
  %v244 = vpop.f32.mrb[0].mxu0
  %v245 = vpop.f32.mrb[0].mxu0
  %v246 = vadd.f32 %v192, %v245
  %v247 = vpop.f32.mrb[0].mxu0
  %248 = vdwg.mxu0
  %v249 = vpack.c.bf16 %v246, %v243
  %251 = vrot.lane.b32.xlu0 %v249, 96
  %v252 = vpop.permute.xlu0 %251
  %vm253 = vcmask 130048
  %v255 = vsel %vm253, %v249, 0
  %v258 = vsel %vm253, %v252, 0
  %260 = vmatprep.subr.bf16.mxu0 0
  %261 = vmatpush1.bf16.xpose.msra.mxu0 %v258
  %262 = vmatprep.subr.bf16.mxu0 0
  %263 = vmatpush1.bf16.xpose.msra.mxu0 0
  %264 = vmatprep.subr.bf16.mxu0 0
  %265 = vmatpush1.bf16.xpose.msra.mxu0 0
  %266 = vmatprep.subr.bf16.mxu0 0
  %267 = vmatpush1.bf16.xpose.msra.mxu0 0
  %268 = vmatprep.subr.bf16.mxu0 0
  %269 = vmatpush1.bf16.xpose.msra.mxu0 0
  %270 = vmatprep.subr.bf16.mxu0 0
  %271 = vmatpush1.bf16.xpose.msra.mxu0 0
  %272 = vmatprep.subr.bf16.mxu0 0
  %273 = vmatpush1.bf16.xpose.msra.mxu0 0
  %274 = vmatprep.subr.bf16.mxu0 0
  %275 = vmatpush1.bf16.xpose.msra.mxu0 0
  %276 = vmatprep.subr.bf16.mxu0 0
  %277 = vmatpush1.bf16.xpose.msra.mxu0 0
  %278 = vmatprep.subr.bf16.mxu0 0
  %279 = vmatpush1.bf16.xpose.msra.mxu0 0
  %280 = vmatprep.subr.bf16.mxu0 0
  %281 = vmatpush1.bf16.xpose.msra.mxu0 0
  %282 = vmatprep.subr.bf16.mxu0 0
  %283 = vmatpush1.bf16.xpose.msra.mxu0 0
  %284 = vmatprep.subr.bf16.mxu0 0
  %285 = vmatpush1.bf16.xpose.msra.mxu0 0
  %286 = vmatprep.subr.bf16.mxu0 0
  %287 = vmatpush1.bf16.xpose.msra.mxu0 0
  %288 = vmatprep.subr.bf16.mxu0 0
  %289 = vmatpush1.bf16.xpose.msra.mxu0 0
  %290 = vmatprep.subr.bf16.mxu0 0
  %291 = vmatpush1.bf16.xpose.msra.mxu0 0
  %292 = vmatprep.mubr.bf16.mxu0 0
  %293 = vmatmul.mubr.bf16.gmra.mrb[0].mxu0 %v255
  %v294 = vpop.f32.mrb[0].mxu0
  %v295 = vadd.f32 %v181, %v294
  %v296 = vpop.f32.mrb[0].mxu0
  %v297 = vpop.f32.mrb[0].mxu0
  %v298 = vadd.f32 %v182, %v297
  %v299 = vpop.f32.mrb[0].mxu0
  %300 = vdwg.mxu0
  %v301 = vsel %vm253, %v295, -inf
  %302 = vmax.xlane.f32.xlu0 %v301
  %v303 = vpop.xlane.xlu0 %302
  %v304 = vsel %vm253, %v298, -inf
  %305 = vmax.xlane.f32.xlu0 %v304
  %v306 = vpop.xlane.xlu0 %305
  %v307 = vsub.f32 %v295, %v303
  %v308 = vsub.f32 %v298, %v306
  %v309 = vmul.f32 %v307, 1.442695
  %v310 = vpow.pop %v309
  %v311 = vmul.f32 %v308, 1.442695
  %v312 = vpow.pop %v311
  %v313 = vsel %vm253, %v310, 0.0
  %314 = vadd.xlane.f32.xlu0 %v313
  %v315 = vpop.xlane.xlu0 %314
  %v316 = vsel %vm253, %v312, 0.0
  %317 = vadd.xlane.f32.xlu0 %v316
  %v318 = vpop.xlane.xlu0 %317
  %v319 = vrcp.pop %v315
  %v320 = vrcp.pop %v318
  %v321 = vmul.f32 %v310, %v319
  %v322 = vmul.f32 %v312, %v320
  %v323 = vpack.c.bf16 %v322, %v321
  %324 = vrot.lane.b32.xlu0 %v249, 64
  %v325 = vpop.permute.xlu0 %324
  %v328 = vsel %vm253, %v323, 0
  %330 = vmatprep.subr.bf16.mxu0 0
  %331 = vmatpush1.bf16.msra.mxu0 %v325
  %332 = vmatprep.subr.bf16.mxu0 0
  %333 = vmatpush1.bf16.msra.mxu0 0
  %334 = vmatprep.subr.bf16.mxu0 0
  %335 = vmatpush1.bf16.msra.mxu0 0
  %336 = vmatprep.subr.bf16.mxu0 0
  %337 = vmatpush1.bf16.msra.mxu0 0
  %338 = vmatprep.subr.bf16.mxu0 0
  %339 = vmatpush1.bf16.msra.mxu0 0
  %340 = vmatprep.subr.bf16.mxu0 0
  %341 = vmatpush1.bf16.msra.mxu0 0
  %342 = vmatprep.subr.bf16.mxu0 0
  %343 = vmatpush1.bf16.msra.mxu0 0
  %344 = vmatprep.subr.bf16.mxu0 0
  %345 = vmatpush1.bf16.msra.mxu0 0
  %346 = vmatprep.subr.bf16.mxu0 0
  %347 = vmatpush1.bf16.msra.mxu0 0
  %348 = vmatprep.subr.bf16.mxu0 0
  %349 = vmatpush1.bf16.msra.mxu0 0
  %350 = vmatprep.subr.bf16.mxu0 0
  %351 = vmatpush1.bf16.msra.mxu0 0
  %352 = vmatprep.subr.bf16.mxu0 0
  %353 = vmatpush1.bf16.msra.mxu0 0
  %354 = vmatprep.subr.bf16.mxu0 0
  %355 = vmatpush1.bf16.msra.mxu0 0
  %356 = vmatprep.subr.bf16.mxu0 0
  %357 = vmatpush1.bf16.msra.mxu0 0
  %358 = vmatprep.subr.bf16.mxu0 0
  %359 = vmatpush1.bf16.msra.mxu0 0
  %360 = vmatprep.subr.bf16.mxu0 0
  %361 = vmatpush1.bf16.msra.mxu0 0
  %362 = vmatprep.mubr.bf16.mxu0 0
  %363 = vmatmul.mubr.bf16.gmra.mrb[0].mxu0 %v328
  %v364 = vpop.f32.mrb[0].mxu0
  %v365 = vadd.f32 0.0, %v364
  %v366 = vpop.f32.mrb[0].mxu0
  %v367 = vpop.f32.mrb[0].mxu0
  %v368 = vadd.f32 0.0, %v367
  %v369 = vpop.f32.mrb[0].mxu0
  %370 = vdwg.mxu0
  %371 = vrot.lane.b32.xlu0 %v249, 112
  %v372 = vpop.permute.xlu0 %371
  %373 = vrot.lane.b32.xlu0 %v249, 80
  %v374 = vpop.permute.xlu0 %373
  %v376 = vsel %vm253, %v372, 0
  %v379 = vsel %vm253, %v374, 0
  %381 = vmatprep.subr.bf16.mxu0 0
  %382 = vmatpush1.bf16.xpose.msra.mxu0 %v379
  %383 = vmatprep.subr.bf16.mxu0 0
  %384 = vmatpush1.bf16.xpose.msra.mxu0 0
  %385 = vmatprep.subr.bf16.mxu0 0
  %386 = vmatpush1.bf16.xpose.msra.mxu0 0
  %387 = vmatprep.subr.bf16.mxu0 0
  %388 = vmatpush1.bf16.xpose.msra.mxu0 0
  %389 = vmatprep.subr.bf16.mxu0 0
  %390 = vmatpush1.bf16.xpose.msra.mxu0 0
  %391 = vmatprep.subr.bf16.mxu0 0
  %392 = vmatpush1.bf16.xpose.msra.mxu0 0
  %393 = vmatprep.subr.bf16.mxu0 0
  %394 = vmatpush1.bf16.xpose.msra.mxu0 0
  %395 = vmatprep.subr.bf16.mxu0 0
  %396 = vmatpush1.bf16.xpose.msra.mxu0 0
  %397 = vmatprep.subr.bf16.mxu0 0
  %398 = vmatpush1.bf16.xpose.msra.mxu0 0
  %399 = vmatprep.subr.bf16.mxu0 0
  %400 = vmatpush1.bf16.xpose.msra.mxu0 0
  %401 = vmatprep.subr.bf16.mxu0 0
  %402 = vmatpush1.bf16.xpose.msra.mxu0 0
  %403 = vmatprep.subr.bf16.mxu0 0
  %404 = vmatpush1.bf16.xpose.msra.mxu0 0
  %405 = vmatprep.subr.bf16.mxu0 0
  %406 = vmatpush1.bf16.xpose.msra.mxu0 0
  %407 = vmatprep.subr.bf16.mxu0 0
  %408 = vmatpush1.bf16.xpose.msra.mxu0 0
  %409 = vmatprep.subr.bf16.mxu0 0
  %410 = vmatpush1.bf16.xpose.msra.mxu0 0
  %411 = vmatprep.subr.bf16.mxu0 0
  %412 = vmatpush1.bf16.xpose.msra.mxu0 0
  %413 = vmatprep.mubr.bf16.mxu0 0
  %414 = vmatmul.mubr.bf16.gmra.mrb[0].mxu0 %v376
  %v415 = vpop.f32.mrb[0].mxu0
  %v416 = vadd.f32 %v181, %v415
  %v417 = vpop.f32.mrb[0].mxu0
  %v418 = vpop.f32.mrb[0].mxu0
  %v419 = vadd.f32 %v182, %v418
  %v420 = vpop.f32.mrb[0].mxu0
  %421 = vdwg.mxu0
  %v422 = vsel %vm253, %v416, -inf
  %423 = vmax.xlane.f32.xlu0 %v422
  %v424 = vpop.xlane.xlu0 %423
  %v425 = vsel %vm253, %v419, -inf
  %426 = vmax.xlane.f32.xlu0 %v425
  %v427 = vpop.xlane.xlu0 %426
  %v428 = vsub.f32 %v416, %v424
  %v429 = vsub.f32 %v419, %v427
  %v430 = vmul.f32 %v428, 1.442695
  %v431 = vpow.pop %v430
  %v432 = vmul.f32 %v429, 1.442695
  %v433 = vpow.pop %v432
  %v434 = vsel %vm253, %v431, 0.0
  %435 = vadd.xlane.f32.xlu0 %v434
  %v436 = vpop.xlane.xlu0 %435
  %v437 = vsel %vm253, %v433, 0.0
  %438 = vadd.xlane.f32.xlu0 %v437
  %v439 = vpop.xlane.xlu0 %438
  %v440 = vrcp.pop %v436
  %v441 = vrcp.pop %v439
  %v442 = vmul.f32 %v431, %v440
  %v443 = vmul.f32 %v433, %v441
  %v444 = vpack.c.bf16 %v443, %v442
  %445 = vrot.lane.b32.xlu0 %v249, 48
  %v446 = vpop.permute.xlu0 %445
  %v449 = vsel %vm253, %v444, 0
  %451 = vmatprep.subr.bf16.mxu0 0
  %452 = vmatpush1.bf16.msra.mxu0 %v446
  %453 = vmatprep.subr.bf16.mxu0 0
  %454 = vmatpush1.bf16.msra.mxu0 0
  %455 = vmatprep.subr.bf16.mxu0 0
  %456 = vmatpush1.bf16.msra.mxu0 0
  %457 = vmatprep.subr.bf16.mxu0 0
  %458 = vmatpush1.bf16.msra.mxu0 0
  %459 = vmatprep.subr.bf16.mxu0 0
  %460 = vmatpush1.bf16.msra.mxu0 0
  %461 = vmatprep.subr.bf16.mxu0 0
  %462 = vmatpush1.bf16.msra.mxu0 0
  %463 = vmatprep.subr.bf16.mxu0 0
  %464 = vmatpush1.bf16.msra.mxu0 0
  %465 = vmatprep.subr.bf16.mxu0 0
  %466 = vmatpush1.bf16.msra.mxu0 0
  %467 = vmatprep.subr.bf16.mxu0 0
  %468 = vmatpush1.bf16.msra.mxu0 0
  %469 = vmatprep.subr.bf16.mxu0 0
  %470 = vmatpush1.bf16.msra.mxu0 0
  %471 = vmatprep.subr.bf16.mxu0 0
  %472 = vmatpush1.bf16.msra.mxu0 0
  %473 = vmatprep.subr.bf16.mxu0 0
  %474 = vmatpush1.bf16.msra.mxu0 0
  %475 = vmatprep.subr.bf16.mxu0 0
  %476 = vmatpush1.bf16.msra.mxu0 0
  %477 = vmatprep.subr.bf16.mxu0 0
  %478 = vmatpush1.bf16.msra.mxu0 0
  %479 = vmatprep.subr.bf16.mxu0 0
  %480 = vmatpush1.bf16.msra.mxu0 0
  %481 = vmatprep.subr.bf16.mxu0 0
  %482 = vmatpush1.bf16.msra.mxu0 0
  %483 = vmatprep.mubr.bf16.mxu0 0
  %484 = vmatmul.mubr.bf16.gmra.mrb[0].mxu0 %v449
  %v485 = vpop.f32.mrb[0].mxu0
  %v486 = vadd.f32 0.0, %v485
  %v487 = vpop.f32.mrb[0].mxu0
  %v488 = vpop.f32.mrb[0].mxu0
  %v489 = vadd.f32 0.0, %v488
  %v490 = vpop.f32.mrb[0].mxu0
  %491 = vdwg.mxu0
  %494 = vrot.lane.b32.xlu0 %v486, 16
  %v495 = vpop.permute.xlu0 %494
  %496 = vrot.lane.b32.xlu0 %v489, 16
  %v497 = vpop.permute.xlu0 %496
  %v500 = vsel %vm253, %v365, %v495
  %v501 = vsel %vm253, %v368, %v497
  %v502 = vpack.c.bf16 %v501, %v500
  %v503 = vld [vmem:[%s4 + $0x3] sm:$0x1]
  %v504 = vlaneseq
  %v505 = vshrl.u32 %v504, 7
  %v506 = vsub.s32 0, %v505
  %v507 = vrot.slane %v503, %v506
  %508 = vrot.lane.b32.xlu0 %v201, 32
  %v509 = vpop.permute.xlu0 %508
  %510 = vrot.lane.b32.xlu0 %v202, 32
  %v511 = vpop.permute.xlu0 %510
  %v515 = vsel %vm123, %v502, 0
  %517 = vmatprep.subr.bf16.mxu0 0
  %518 = vmatpush1.bf16.msra.mxu0 %v509
  %519 = vmatprep.subr.bf16.mxu0 0
  %520 = vmatpush1.bf16.msra.mxu0 %v511
  %521 = vmatprep.subr.bf16.mxu0 0
  %522 = vmatpush1.bf16.msra.mxu0 0
  %523 = vmatprep.subr.bf16.mxu0 0
  %524 = vmatpush1.bf16.msra.mxu0 0
  %525 = vmatprep.subr.bf16.mxu0 0
  %526 = vmatpush1.bf16.msra.mxu0 0
  %527 = vmatprep.subr.bf16.mxu0 0
  %528 = vmatpush1.bf16.msra.mxu0 0
  %529 = vmatprep.subr.bf16.mxu0 0
  %530 = vmatpush1.bf16.msra.mxu0 0
  %531 = vmatprep.subr.bf16.mxu0 0
  %532 = vmatpush1.bf16.msra.mxu0 0
  %533 = vmatprep.subr.bf16.mxu0 0
  %534 = vmatpush1.bf16.msra.mxu0 0
  %535 = vmatprep.subr.bf16.mxu0 0
  %536 = vmatpush1.bf16.msra.mxu0 0
  %537 = vmatprep.subr.bf16.mxu0 0
  %538 = vmatpush1.bf16.msra.mxu0 0
  %539 = vmatprep.subr.bf16.mxu0 0
  %540 = vmatpush1.bf16.msra.mxu0 0
  %541 = vmatprep.subr.bf16.mxu0 0
  %542 = vmatpush1.bf16.msra.mxu0 0
  %543 = vmatprep.subr.bf16.mxu0 0
  %544 = vmatpush1.bf16.msra.mxu0 0
  %545 = vmatprep.subr.bf16.mxu0 0
  %546 = vmatpush1.bf16.msra.mxu0 0
  %547 = vmatprep.subr.bf16.mxu0 0
  %548 = vmatpush1.bf16.msra.mxu0 0
  %549 = vmatprep.mubr.bf16.mxu0 0
  %550 = vmatmul.mubr.bf16.gmra.mrb[0].mxu0 %v515
  %v551 = vpop.f32.mrb[0].mxu0
  %v552 = vadd.f32 %v507, %v551
  %v553 = vpop.f32.mrb[0].mxu0
  %v554 = vpop.f32.mrb[0].mxu0
  %v555 = vadd.f32 %v507, %v554
  %v556 = vpop.f32.mrb[0].mxu0
  %557 = vdwg.mxu0
  %v558 = vadd.f32 %v552, %v161
  %v559 = vadd.f32 %v555, %v162
  %v560 = vld [vmem:[%s4 + $0x4] sm:$0x1]
  %v561 = vld [vmem:[%s4 + $0x5] sm:$0x1]
  %v562 = vsel %vm123, %v558, 0.0
  %563 = vadd.xlane.f32.xlu0 %v562
  %v564 = vpop.xlane.xlu0 %563
  %v565 = vsel %vm123, %v559, 0.0
  %566 = vadd.xlane.f32.xlu0 %v565
  %v567 = vpop.xlane.xlu0 %566
  %v568 = vmul.f32 %v564, %v130
  %v569 = vmul.f32 %v567, %v130
  %v570 = vsub.f32 %v558, %v568
  %v571 = vsub.f32 %v559, %v569
  %v572 = vmul.f32 %v570, %v570
  %v573 = vmul.f32 %v571, %v571
  %v574 = vsel %vm123, %v572, 0.0
  %575 = vadd.xlane.f32.xlu0 %v574
  %v576 = vpop.xlane.xlu0 %575
  %v577 = vsel %vm123, %v573, 0.0
  %578 = vadd.xlane.f32.xlu0 %v577
  %v579 = vpop.xlane.xlu0 %578
  %v580 = vmul.f32 %v576, %v130
  %v581 = vmul.f32 %v579, %v130
  %v582 = vadd.f32 %v580, 1e-12
  %v583 = vadd.f32 %v581, 1e-12
  %v584 = vrsqrt.pop %v582
  %v585 = vrsqrt.pop %v583
  %v586 = vmul.f32 %v570, %v584
  %v587 = vmul.f32 %v571, %v585
  %v588 = vlaneseq
  %v589 = vshrl.u32 %v588, 7
  %v590 = vsub.s32 0, %v589
  %v591 = vrot.slane %v560, %v590
  %v592 = vmul.f32 %v586, %v591
  %v593 = vmul.f32 %v587, %v591
  %v594 = vlaneseq
  %v595 = vshrl.u32 %v594, 7
  %v596 = vsub.s32 0, %v595
  %v597 = vrot.slane %v561, %v596
  %v598 = vadd.f32 %v592, %v597
  %v599 = vadd.f32 %v593, %v597
  %v600 = vld [vmem:[%s6] sm:$0xf]
  %v601 = vld [vmem:[%s6 + $0x4] sm:$0xf]
  %v602 = vld [vmem:[%s6 + $0x8] sm:$0xf]
  %v603 = vld [vmem:[%s6 + $0xc] sm:$0xf]
  %v604 = vld [vmem:[%s6 + $0x10] sm:$0xf]
  %v605 = vld [vmem:[%s6 + $0x14] sm:$0xf]
  %v606 = vld [vmem:[%s6 + $0x18] sm:$0xf]
  %v607 = vld [vmem:[%s6 + $0x1c] sm:$0xf]
  %v608 = vld [vmem:[%s6 + $0x20] sm:$0xf]
  %v609 = vld [vmem:[%s6 + $0x24] sm:$0xf]
  %v610 = vld [vmem:[%s6 + $0x28] sm:$0xf]
  %v611 = vld [vmem:[%s6 + $0x2c] sm:$0xf]
  %v612 = vpack.c.bf16 %v599, %v598
  %v613 = vld [vmem:[%s4 + $0x6] sm:$0x1]
  %v614 = vlaneseq
  %v615 = vshrl.u32 %v614, 7
  %v616 = vsub.s32 0, %v615
  %v617 = vrot.slane %v613, %v616
  %v622 = vunpack.c.l.b16 %v600
  %v623 = vunpack.c.l.b16 %v601
  %v624 = vunpack.c.l.b16 %v602
  %v625 = vunpack.c.l.b16 %v603
  %v626 = vpack.c.b16 %v623, %v622
  %v627 = vpack.c.b16 %v625, %v624
  %v631 = vsel %vm123, %v612, 0
  %633 = vmatprep.subr.bf16.mxu0 0
  %634 = vmatpush1.bf16.msra.mxu0 %v626
  %635 = vmatprep.subr.bf16.mxu0 0
  %636 = vmatpush1.bf16.msra.mxu0 %v627
  %637 = vmatprep.subr.bf16.mxu0 0
  %638 = vmatpush1.bf16.msra.mxu0 0
  %639 = vmatprep.subr.bf16.mxu0 0
  %640 = vmatpush1.bf16.msra.mxu0 0
  %641 = vmatprep.subr.bf16.mxu0 0
  %642 = vmatpush1.bf16.msra.mxu0 0
  %643 = vmatprep.subr.bf16.mxu0 0
  %644 = vmatpush1.bf16.msra.mxu0 0
  %645 = vmatprep.subr.bf16.mxu0 0
  %646 = vmatpush1.bf16.msra.mxu0 0
  %647 = vmatprep.subr.bf16.mxu0 0
  %648 = vmatpush1.bf16.msra.mxu0 0
  %649 = vmatprep.subr.bf16.mxu0 0
  %650 = vmatpush1.bf16.msra.mxu0 0
  %651 = vmatprep.subr.bf16.mxu0 0
  %652 = vmatpush1.bf16.msra.mxu0 0
  %653 = vmatprep.subr.bf16.mxu0 0
  %654 = vmatpush1.bf16.msra.mxu0 0
  %655 = vmatprep.subr.bf16.mxu0 0
  %656 = vmatpush1.bf16.msra.mxu0 0
  %657 = vmatprep.subr.bf16.mxu0 0
  %658 = vmatpush1.bf16.msra.mxu0 0
  %659 = vmatprep.subr.bf16.mxu0 0
  %660 = vmatpush1.bf16.msra.mxu0 0
  %661 = vmatprep.subr.bf16.mxu0 0
  %662 = vmatpush1.bf16.msra.mxu0 0
  %663 = vmatprep.subr.bf16.mxu0 0
  %664 = vmatpush1.bf16.msra.mxu0 0
  %665 = vmatprep.mubr.bf16.mxu0 0
  %666 = vmatmul.mubr.bf16.gmra.mrb[0].mxu0 %v631
  %v667 = vpop.f32.mrb[0].mxu0
  %v668 = vadd.f32 %v617, %v667
  %v669 = vpop.f32.mrb[0].mxu0
  %v670 = vpop.f32.mrb[0].mxu0
  %v671 = vadd.f32 %v617, %v670
  %v672 = vpop.f32.mrb[0].mxu0
  %673 = vdwg.mxu0
  %v674 = vmul.f32 %v668, %v668
  %v675 = vmul.f32 %v671, %v671
  %v676 = vmul.f32 %v668, %v674
  %v677 = vmul.f32 %v671, %v675
  %v678 = vmul.f32 %v676, 0.044715
  %v679 = vmul.f32 %v677, 0.044715
  %v680 = vadd.f32 %v668, %v678
  %v681 = vadd.f32 %v671, %v679
  %v682 = vmul.f32 %v680, 0.7978846
  %v683 = vmul.f32 %v681, 0.7978846
  %v684 = vtanh.pop %v682
  %v685 = vtanh.pop %v683
  %v686 = vadd.f32 %v684, 1.0
  %v687 = vadd.f32 %v685, 1.0
  %v688 = vmul.f32 %v686, 0.5
  %v689 = vmul.f32 %v687, 0.5
  %v690 = vmul.f32 %v668, %v688
  %v691 = vmul.f32 %v671, %v689
  %v692 = vpack.c.bf16 %v691, %v690
  %v693 = vld [vmem:[%s4 + $0x7] sm:$0x1]
  %v694 = vlaneseq
  %v695 = vshrl.u32 %v694, 7
  %v696 = vsub.s32 0, %v695
  %v697 = vrot.slane %v693, %v696
  %v706 = vunpack.c.l.b16 %v604
  %v707 = vunpack.c.l.b16 %v605
  %v708 = vunpack.c.l.b16 %v606
  %v709 = vunpack.c.l.b16 %v607
  %v710 = vunpack.c.l.b16 %v608
  %v711 = vunpack.c.l.b16 %v609
  %v712 = vunpack.c.l.b16 %v610
  %v713 = vunpack.c.l.b16 %v611
  %v714 = vpack.c.b16 %v707, %v706
  %v715 = vpack.c.b16 %v709, %v708
  %v716 = vpack.c.b16 %v711, %v710
  %v717 = vpack.c.b16 %v713, %v712
  %v723 = vsel %vm76, %v692, 0
  %725 = vmatprep.subr.bf16.mxu0 0
  %726 = vmatpush1.bf16.msra.mxu0 %v714
  %727 = vmatprep.subr.bf16.mxu0 0
  %728 = vmatpush1.bf16.msra.mxu0 %v715
  %729 = vmatprep.subr.bf16.mxu0 0
  %730 = vmatpush1.bf16.msra.mxu0 %v716
  %731 = vmatprep.subr.bf16.mxu0 0
  %732 = vmatpush1.bf16.msra.mxu0 %v717
  %733 = vmatprep.subr.bf16.mxu0 0
  %734 = vmatpush1.bf16.msra.mxu0 0
  %735 = vmatprep.subr.bf16.mxu0 0
  %736 = vmatpush1.bf16.msra.mxu0 0
  %737 = vmatprep.subr.bf16.mxu0 0
  %738 = vmatpush1.bf16.msra.mxu0 0
  %739 = vmatprep.subr.bf16.mxu0 0
  %740 = vmatpush1.bf16.msra.mxu0 0
  %741 = vmatprep.subr.bf16.mxu0 0
  %742 = vmatpush1.bf16.msra.mxu0 0
  %743 = vmatprep.subr.bf16.mxu0 0
  %744 = vmatpush1.bf16.msra.mxu0 0
  %745 = vmatprep.subr.bf16.mxu0 0
  %746 = vmatpush1.bf16.msra.mxu0 0
  %747 = vmatprep.subr.bf16.mxu0 0
  %748 = vmatpush1.bf16.msra.mxu0 0
  %749 = vmatprep.subr.bf16.mxu0 0
  %750 = vmatpush1.bf16.msra.mxu0 0
  %751 = vmatprep.subr.bf16.mxu0 0
  %752 = vmatpush1.bf16.msra.mxu0 0
  %753 = vmatprep.subr.bf16.mxu0 0
  %754 = vmatpush1.bf16.msra.mxu0 0
  %755 = vmatprep.subr.bf16.mxu0 0
  %756 = vmatpush1.bf16.msra.mxu0 0
  %757 = vmatprep.mubr.bf16.mxu0 0
  %758 = vmatmul.mubr.bf16.gmra.mrb[0].mxu0 %v723
  %v759 = vpop.f32.mrb[0].mxu0
  %v760 = vadd.f32 %v697, %v759
  %v761 = vpop.f32.mrb[0].mxu0
  %v762 = vpop.f32.mrb[0].mxu0
  %v763 = vadd.f32 %v697, %v762
  %v764 = vpop.f32.mrb[0].mxu0
  %765 = vdwg.mxu0
  %v766 = vadd.f32 %v760, %v598
  %v767 = vadd.f32 %v763, %v599
  %v768 = vld [vmem:[%s4 + $0x8] sm:$0x1]
  %v769 = vld [vmem:[%s4 + $0x9] sm:$0x1]
  %v770 = vsel %vm123, %v766, 0.0
  %771 = vadd.xlane.f32.xlu0 %v770
  %v772 = vpop.xlane.xlu0 %771
  %v773 = vsel %vm123, %v767, 0.0
  %774 = vadd.xlane.f32.xlu0 %v773
  %v775 = vpop.xlane.xlu0 %774
  %v776 = vmul.f32 %v772, %v130
  %v777 = vmul.f32 %v775, %v130
  %v778 = vsub.f32 %v766, %v776
  %v779 = vsub.f32 %v767, %v777
  %v780 = vmul.f32 %v778, %v778
  %v781 = vmul.f32 %v779, %v779
  %v782 = vsel %vm123, %v780, 0.0
  %783 = vadd.xlane.f32.xlu0 %v782
  %v784 = vpop.xlane.xlu0 %783
  %v785 = vsel %vm123, %v781, 0.0
  %786 = vadd.xlane.f32.xlu0 %v785
  %v787 = vpop.xlane.xlu0 %786
  %v788 = vmul.f32 %v784, %v130
  %v789 = vmul.f32 %v787, %v130
  %v790 = vadd.f32 %v788, 1e-12
  %v791 = vadd.f32 %v789, 1e-12
  %v792 = vrsqrt.pop %v790
  %v793 = vrsqrt.pop %v791
  %v794 = vmul.f32 %v778, %v792
  %v795 = vmul.f32 %v779, %v793
  %v796 = vlaneseq
  %v797 = vshrl.u32 %v796, 7
  %v798 = vsub.s32 0, %v797
  %v799 = vrot.slane %v768, %v798
  %v800 = vmul.f32 %v794, %v799
  %v801 = vmul.f32 %v795, %v799
  %v802 = vlaneseq
  %v803 = vshrl.u32 %v802, 7
  %v804 = vsub.s32 0, %v803
  %v805 = vrot.slane %v769, %v804
  %v806 = vadd.f32 %v800, %v805
  %v807 = vadd.f32 %v801, %v805
  %s808 = scalar_lea.vmem %s5, 16
  %v809 = vld [vmem:[%s808] sm:$0xf]
  %v810 = vld [vmem:[%s808 + $0x4] sm:$0xf]
  %v811 = vld [vmem:[%s808 + $0x8] sm:$0xf]
  %v812 = vld [vmem:[%s808 + $0xc] sm:$0xf]
  %v813 = vpack.c.bf16 %v807, %v806
  %v814 = vld [vmem:[%s4 + $0xa] sm:$0x1]
  %v815 = vlaneseq
  %v816 = vshrl.u32 %v815, 7
  %v817 = vsub.s32 0, %v816
  %v818 = vrot.slane %v814, %v817
  %v823 = vunpack.c.l.b16 %v809
  %v824 = vunpack.c.l.b16 %v810
  %v825 = vunpack.c.l.b16 %v811
  %v826 = vunpack.c.l.b16 %v812
  %v827 = vpack.c.b16 %v824, %v823
  %v828 = vpack.c.b16 %v826, %v825
  %v832 = vsel %vm123, %v813, 0
  %834 = vmatprep.subr.bf16.mxu0 0
  %835 = vmatpush1.bf16.msra.mxu0 %v827
  %836 = vmatprep.subr.bf16.mxu0 0
  %837 = vmatpush1.bf16.msra.mxu0 %v828
  %838 = vmatprep.subr.bf16.mxu0 0
  %839 = vmatpush1.bf16.msra.mxu0 0
  %840 = vmatprep.subr.bf16.mxu0 0
  %841 = vmatpush1.bf16.msra.mxu0 0
  %842 = vmatprep.subr.bf16.mxu0 0
  %843 = vmatpush1.bf16.msra.mxu0 0
  %844 = vmatprep.subr.bf16.mxu0 0
  %845 = vmatpush1.bf16.msra.mxu0 0
  %846 = vmatprep.subr.bf16.mxu0 0
  %847 = vmatpush1.bf16.msra.mxu0 0
  %848 = vmatprep.subr.bf16.mxu0 0
  %849 = vmatpush1.bf16.msra.mxu0 0
  %850 = vmatprep.subr.bf16.mxu0 0
  %851 = vmatpush1.bf16.msra.mxu0 0
  %852 = vmatprep.subr.bf16.mxu0 0
  %853 = vmatpush1.bf16.msra.mxu0 0
  %854 = vmatprep.subr.bf16.mxu0 0
  %855 = vmatpush1.bf16.msra.mxu0 0
  %856 = vmatprep.subr.bf16.mxu0 0
  %857 = vmatpush1.bf16.msra.mxu0 0
  %858 = vmatprep.subr.bf16.mxu0 0
  %859 = vmatpush1.bf16.msra.mxu0 0
  %860 = vmatprep.subr.bf16.mxu0 0
  %861 = vmatpush1.bf16.msra.mxu0 0
  %862 = vmatprep.subr.bf16.mxu0 0
  %863 = vmatpush1.bf16.msra.mxu0 0
  %864 = vmatprep.subr.bf16.mxu0 0
  %865 = vmatpush1.bf16.msra.mxu0 0
  %866 = vmatprep.mubr.bf16.mxu0 0
  %867 = vmatmul.mubr.bf16.gmra.mrb[0].mxu0 %v832
  %v868 = vpop.f32.mrb[0].mxu0
  %v869 = vadd.f32 %v818, %v868
  %v870 = vpop.f32.mrb[0].mxu0
  %v871 = vpop.f32.mrb[0].mxu0
  %v872 = vadd.f32 %v818, %v871
  %v873 = vpop.f32.mrb[0].mxu0
  %874 = vdwg.mxu0
  %v875 = vpack.c.bf16 %v872, %v869
  %877 = vrot.lane.b32.xlu0 %v875, 96
  %v878 = vpop.permute.xlu0 %877
  %v880 = vsel %vm253, %v875, 0
  %v883 = vsel %vm253, %v878, 0
  %885 = vmatprep.subr.bf16.mxu0 0
  %886 = vmatpush1.bf16.xpose.msra.mxu0 %v883
  %887 = vmatprep.subr.bf16.mxu0 0
  %888 = vmatpush1.bf16.xpose.msra.mxu0 0
  %889 = vmatprep.subr.bf16.mxu0 0
  %890 = vmatpush1.bf16.xpose.msra.mxu0 0
  %891 = vmatprep.subr.bf16.mxu0 0
  %892 = vmatpush1.bf16.xpose.msra.mxu0 0
  %893 = vmatprep.subr.bf16.mxu0 0
  %894 = vmatpush1.bf16.xpose.msra.mxu0 0
  %895 = vmatprep.subr.bf16.mxu0 0
  %896 = vmatpush1.bf16.xpose.msra.mxu0 0
  %897 = vmatprep.subr.bf16.mxu0 0
  %898 = vmatpush1.bf16.xpose.msra.mxu0 0
  %899 = vmatprep.subr.bf16.mxu0 0
  %900 = vmatpush1.bf16.xpose.msra.mxu0 0
  %901 = vmatprep.subr.bf16.mxu0 0
  %902 = vmatpush1.bf16.xpose.msra.mxu0 0
  %903 = vmatprep.subr.bf16.mxu0 0
  %904 = vmatpush1.bf16.xpose.msra.mxu0 0
  %905 = vmatprep.subr.bf16.mxu0 0
  %906 = vmatpush1.bf16.xpose.msra.mxu0 0
  %907 = vmatprep.subr.bf16.mxu0 0
  %908 = vmatpush1.bf16.xpose.msra.mxu0 0
  %909 = vmatprep.subr.bf16.mxu0 0
  %910 = vmatpush1.bf16.xpose.msra.mxu0 0
  %911 = vmatprep.subr.bf16.mxu0 0
  %912 = vmatpush1.bf16.xpose.msra.mxu0 0
  %913 = vmatprep.subr.bf16.mxu0 0
  %914 = vmatpush1.bf16.xpose.msra.mxu0 0
  %915 = vmatprep.subr.bf16.mxu0 0
  %916 = vmatpush1.bf16.xpose.msra.mxu0 0
  %917 = vmatprep.mubr.bf16.mxu0 0
  %918 = vmatmul.mubr.bf16.gmra.mrb[0].mxu0 %v880
  %v919 = vpop.f32.mrb[0].mxu0
  %v920 = vadd.f32 %v181, %v919
  %v921 = vpop.f32.mrb[0].mxu0
  %v922 = vpop.f32.mrb[0].mxu0
  %v923 = vadd.f32 %v182, %v922
  %v924 = vpop.f32.mrb[0].mxu0
  %925 = vdwg.mxu0
  %v926 = vsel %vm253, %v920, -inf
  %927 = vmax.xlane.f32.xlu0 %v926
  %v928 = vpop.xlane.xlu0 %927
  %v929 = vsel %vm253, %v923, -inf
  %930 = vmax.xlane.f32.xlu0 %v929
  %v931 = vpop.xlane.xlu0 %930
  %v932 = vsub.f32 %v920, %v928
  %v933 = vsub.f32 %v923, %v931
  %v934 = vmul.f32 %v932, 1.442695
  %v935 = vpow.pop %v934
  %v936 = vmul.f32 %v933, 1.442695
  %v937 = vpow.pop %v936
  %v938 = vsel %vm253, %v935, 0.0
  %939 = vadd.xlane.f32.xlu0 %v938
  %v940 = vpop.xlane.xlu0 %939
  %v941 = vsel %vm253, %v937, 0.0
  %942 = vadd.xlane.f32.xlu0 %v941
  %v943 = vpop.xlane.xlu0 %942
  %v944 = vrcp.pop %v940
  %v945 = vrcp.pop %v943
  %v946 = vmul.f32 %v935, %v944
  %v947 = vmul.f32 %v937, %v945
  %v948 = vpack.c.bf16 %v947, %v946
  %949 = vrot.lane.b32.xlu0 %v875, 64
  %v950 = vpop.permute.xlu0 %949
  %v953 = vsel %vm253, %v948, 0
  %955 = vmatprep.subr.bf16.mxu0 0
  %956 = vmatpush1.bf16.msra.mxu0 %v950
  %957 = vmatprep.subr.bf16.mxu0 0
  %958 = vmatpush1.bf16.msra.mxu0 0
  %959 = vmatprep.subr.bf16.mxu0 0
  %960 = vmatpush1.bf16.msra.mxu0 0
  %961 = vmatprep.subr.bf16.mxu0 0
  %962 = vmatpush1.bf16.msra.mxu0 0
  %963 = vmatprep.subr.bf16.mxu0 0
  %964 = vmatpush1.bf16.msra.mxu0 0
  %965 = vmatprep.subr.bf16.mxu0 0
  %966 = vmatpush1.bf16.msra.mxu0 0
  %967 = vmatprep.subr.bf16.mxu0 0
  %968 = vmatpush1.bf16.msra.mxu0 0
  %969 = vmatprep.subr.bf16.mxu0 0
  %970 = vmatpush1.bf16.msra.mxu0 0
  %971 = vmatprep.subr.bf16.mxu0 0
  %972 = vmatpush1.bf16.msra.mxu0 0
  %973 = vmatprep.subr.bf16.mxu0 0
  %974 = vmatpush1.bf16.msra.mxu0 0
  %975 = vmatprep.subr.bf16.mxu0 0
  %976 = vmatpush1.bf16.msra.mxu0 0
  %977 = vmatprep.subr.bf16.mxu0 0
  %978 = vmatpush1.bf16.msra.mxu0 0
  %979 = vmatprep.subr.bf16.mxu0 0
  %980 = vmatpush1.bf16.msra.mxu0 0
  %981 = vmatprep.subr.bf16.mxu0 0
  %982 = vmatpush1.bf16.msra.mxu0 0
  %983 = vmatprep.subr.bf16.mxu0 0
  %984 = vmatpush1.bf16.msra.mxu0 0
  %985 = vmatprep.subr.bf16.mxu0 0
  %986 = vmatpush1.bf16.msra.mxu0 0
  %987 = vmatprep.mubr.bf16.mxu0 0
  %988 = vmatmul.mubr.bf16.gmra.mrb[0].mxu0 %v953
  %v989 = vpop.f32.mrb[0].mxu0
  %v990 = vadd.f32 0.0, %v989
  %v991 = vpop.f32.mrb[0].mxu0
  %v992 = vpop.f32.mrb[0].mxu0
  %v993 = vadd.f32 0.0, %v992
  %v994 = vpop.f32.mrb[0].mxu0
  %995 = vdwg.mxu0
  %996 = vrot.lane.b32.xlu0 %v875, 112
  %v997 = vpop.permute.xlu0 %996
  %998 = vrot.lane.b32.xlu0 %v875, 80
  %v999 = vpop.permute.xlu0 %998
  %v1001 = vsel %vm253, %v997, 0
  %v1004 = vsel %vm253, %v999, 0
  %1006 = vmatprep.subr.bf16.mxu0 0
  %1007 = vmatpush1.bf16.xpose.msra.mxu0 %v1004
  %1008 = vmatprep.subr.bf16.mxu0 0
  %1009 = vmatpush1.bf16.xpose.msra.mxu0 0
  %1010 = vmatprep.subr.bf16.mxu0 0
  %1011 = vmatpush1.bf16.xpose.msra.mxu0 0
  %1012 = vmatprep.subr.bf16.mxu0 0
  %1013 = vmatpush1.bf16.xpose.msra.mxu0 0
  %1014 = vmatprep.subr.bf16.mxu0 0
  %1015 = vmatpush1.bf16.xpose.msra.mxu0 0
  %1016 = vmatprep.subr.bf16.mxu0 0
  %1017 = vmatpush1.bf16.xpose.msra.mxu0 0
  %1018 = vmatprep.subr.bf16.mxu0 0
  %1019 = vmatpush1.bf16.xpose.msra.mxu0 0
  %1020 = vmatprep.subr.bf16.mxu0 0
  %1021 = vmatpush1.bf16.xpose.msra.mxu0 0
  %1022 = vmatprep.subr.bf16.mxu0 0
  %1023 = vmatpush1.bf16.xpose.msra.mxu0 0
  %1024 = vmatprep.subr.bf16.mxu0 0
  %1025 = vmatpush1.bf16.xpose.msra.mxu0 0
  %1026 = vmatprep.subr.bf16.mxu0 0
  %1027 = vmatpush1.bf16.xpose.msra.mxu0 0
  %1028 = vmatprep.subr.bf16.mxu0 0
  %1029 = vmatpush1.bf16.xpose.msra.mxu0 0
  %1030 = vmatprep.subr.bf16.mxu0 0
  %1031 = vmatpush1.bf16.xpose.msra.mxu0 0
  %1032 = vmatprep.subr.bf16.mxu0 0
  %1033 = vmatpush1.bf16.xpose.msra.mxu0 0
  %1034 = vmatprep.subr.bf16.mxu0 0
  %1035 = vmatpush1.bf16.xpose.msra.mxu0 0
  %1036 = vmatprep.subr.bf16.mxu0 0
  %1037 = vmatpush1.bf16.xpose.msra.mxu0 0
  %1038 = vmatprep.mubr.bf16.mxu0 0
  %1039 = vmatmul.mubr.bf16.gmra.mrb[0].mxu0 %v1001
  %v1040 = vpop.f32.mrb[0].mxu0
  %v1041 = vadd.f32 %v181, %v1040
  %v1042 = vpop.f32.mrb[0].mxu0
  %v1043 = vpop.f32.mrb[0].mxu0
  %v1044 = vadd.f32 %v182, %v1043
  %v1045 = vpop.f32.mrb[0].mxu0
  %1046 = vdwg.mxu0
  %v1047 = vsel %vm253, %v1041, -inf
  %1048 = vmax.xlane.f32.xlu0 %v1047
  %v1049 = vpop.xlane.xlu0 %1048
  %v1050 = vsel %vm253, %v1044, -inf
  %1051 = vmax.xlane.f32.xlu0 %v1050
  %v1052 = vpop.xlane.xlu0 %1051
  %v1053 = vsub.f32 %v1041, %v1049
  %v1054 = vsub.f32 %v1044, %v1052
  %v1055 = vmul.f32 %v1053, 1.442695
  %v1056 = vpow.pop %v1055
  %v1057 = vmul.f32 %v1054, 1.442695
  %v1058 = vpow.pop %v1057
  %v1059 = vsel %vm253, %v1056, 0.0
  %1060 = vadd.xlane.f32.xlu0 %v1059
  %v1061 = vpop.xlane.xlu0 %1060
  %v1062 = vsel %vm253, %v1058, 0.0
  %1063 = vadd.xlane.f32.xlu0 %v1062
  %v1064 = vpop.xlane.xlu0 %1063
  %v1065 = vrcp.pop %v1061
  %v1066 = vrcp.pop %v1064
  %v1067 = vmul.f32 %v1056, %v1065
  %v1068 = vmul.f32 %v1058, %v1066
  %v1069 = vpack.c.bf16 %v1068, %v1067
  %1070 = vrot.lane.b32.xlu0 %v875, 48
  %v1071 = vpop.permute.xlu0 %1070
  %v1074 = vsel %vm253, %v1069, 0
  %1076 = vmatprep.subr.bf16.mxu0 0
  %1077 = vmatpush1.bf16.msra.mxu0 %v1071
  %1078 = vmatprep.subr.bf16.mxu0 0
  %1079 = vmatpush1.bf16.msra.mxu0 0
  %1080 = vmatprep.subr.bf16.mxu0 0
  %1081 = vmatpush1.bf16.msra.mxu0 0
  %1082 = vmatprep.subr.bf16.mxu0 0
  %1083 = vmatpush1.bf16.msra.mxu0 0
  %1084 = vmatprep.subr.bf16.mxu0 0
  %1085 = vmatpush1.bf16.msra.mxu0 0
  %1086 = vmatprep.subr.bf16.mxu0 0
  %1087 = vmatpush1.bf16.msra.mxu0 0
  %1088 = vmatprep.subr.bf16.mxu0 0
  %1089 = vmatpush1.bf16.msra.mxu0 0
  %1090 = vmatprep.subr.bf16.mxu0 0
  %1091 = vmatpush1.bf16.msra.mxu0 0
  %1092 = vmatprep.subr.bf16.mxu0 0
  %1093 = vmatpush1.bf16.msra.mxu0 0
  %1094 = vmatprep.subr.bf16.mxu0 0
  %1095 = vmatpush1.bf16.msra.mxu0 0
  %1096 = vmatprep.subr.bf16.mxu0 0
  %1097 = vmatpush1.bf16.msra.mxu0 0
  %1098 = vmatprep.subr.bf16.mxu0 0
  %1099 = vmatpush1.bf16.msra.mxu0 0
  %1100 = vmatprep.subr.bf16.mxu0 0
  %1101 = vmatpush1.bf16.msra.mxu0 0
  %1102 = vmatprep.subr.bf16.mxu0 0
  %1103 = vmatpush1.bf16.msra.mxu0 0
  %1104 = vmatprep.subr.bf16.mxu0 0
  %1105 = vmatpush1.bf16.msra.mxu0 0
  %1106 = vmatprep.subr.bf16.mxu0 0
  %1107 = vmatpush1.bf16.msra.mxu0 0
  %1108 = vmatprep.mubr.bf16.mxu0 0
  %1109 = vmatmul.mubr.bf16.gmra.mrb[0].mxu0 %v1074
  %v1110 = vpop.f32.mrb[0].mxu0
  %v1111 = vadd.f32 0.0, %v1110
  %v1112 = vpop.f32.mrb[0].mxu0
  %v1113 = vpop.f32.mrb[0].mxu0
  %v1114 = vadd.f32 0.0, %v1113
  %v1115 = vpop.f32.mrb[0].mxu0
  %1116 = vdwg.mxu0
  %1119 = vrot.lane.b32.xlu0 %v1111, 16
  %v1120 = vpop.permute.xlu0 %1119
  %1121 = vrot.lane.b32.xlu0 %v1114, 16
  %v1122 = vpop.permute.xlu0 %1121
  %v1125 = vsel %vm253, %v990, %v1120
  %v1126 = vsel %vm253, %v993, %v1122
  %v1127 = vpack.c.bf16 %v1126, %v1125
  %v1128 = vld [vmem:[%s4 + $0xb] sm:$0x1]
  %v1129 = vlaneseq
  %v1130 = vshrl.u32 %v1129, 7
  %v1131 = vsub.s32 0, %v1130
  %v1132 = vrot.slane %v1128, %v1131
  %1133 = vrot.lane.b32.xlu0 %v827, 32
  %v1134 = vpop.permute.xlu0 %1133
  %1135 = vrot.lane.b32.xlu0 %v828, 32
  %v1136 = vpop.permute.xlu0 %1135
  %v1140 = vsel %vm123, %v1127, 0
  %1142 = vmatprep.subr.bf16.mxu0 0
  %1143 = vmatpush1.bf16.msra.mxu0 %v1134
  %1144 = vmatprep.subr.bf16.mxu0 0
  %1145 = vmatpush1.bf16.msra.mxu0 %v1136
  %1146 = vmatprep.subr.bf16.mxu0 0
  %1147 = vmatpush1.bf16.msra.mxu0 0
  %1148 = vmatprep.subr.bf16.mxu0 0
  %1149 = vmatpush1.bf16.msra.mxu0 0
  %1150 = vmatprep.subr.bf16.mxu0 0
  %1151 = vmatpush1.bf16.msra.mxu0 0
  %1152 = vmatprep.subr.bf16.mxu0 0
  %1153 = vmatpush1.bf16.msra.mxu0 0
  %1154 = vmatprep.subr.bf16.mxu0 0
  %1155 = vmatpush1.bf16.msra.mxu0 0
  %1156 = vmatprep.subr.bf16.mxu0 0
  %1157 = vmatpush1.bf16.msra.mxu0 0
  %1158 = vmatprep.subr.bf16.mxu0 0
  %1159 = vmatpush1.bf16.msra.mxu0 0
  %1160 = vmatprep.subr.bf16.mxu0 0
  %1161 = vmatpush1.bf16.msra.mxu0 0
  %1162 = vmatprep.subr.bf16.mxu0 0
  %1163 = vmatpush1.bf16.msra.mxu0 0
  %1164 = vmatprep.subr.bf16.mxu0 0
  %1165 = vmatpush1.bf16.msra.mxu0 0
  %1166 = vmatprep.subr.bf16.mxu0 0
  %1167 = vmatpush1.bf16.msra.mxu0 0
  %1168 = vmatprep.subr.bf16.mxu0 0
  %1169 = vmatpush1.bf16.msra.mxu0 0
  %1170 = vmatprep.subr.bf16.mxu0 0
  %1171 = vmatpush1.bf16.msra.mxu0 0
  %1172 = vmatprep.subr.bf16.mxu0 0
  %1173 = vmatpush1.bf16.msra.mxu0 0
  %1174 = vmatprep.mubr.bf16.mxu0 0
  %1175 = vmatmul.mubr.bf16.gmra.mrb[0].mxu0 %v1140
  %v1176 = vpop.f32.mrb[0].mxu0
  %v1177 = vadd.f32 %v1132, %v1176
  %v1178 = vpop.f32.mrb[0].mxu0
  %v1179 = vpop.f32.mrb[0].mxu0
  %v1180 = vadd.f32 %v1132, %v1179
  %v1181 = vpop.f32.mrb[0].mxu0
  %1182 = vdwg.mxu0
  %v1183 = vadd.f32 %v1177, %v806
  %v1184 = vadd.f32 %v1180, %v807
  %v1185 = vld [vmem:[%s4 + $0xc] sm:$0x1]
  %v1186 = vld [vmem:[%s4 + $0xd] sm:$0x1]
  %v1187 = vsel %vm123, %v1183, 0.0
  %1188 = vadd.xlane.f32.xlu0 %v1187
  %v1189 = vpop.xlane.xlu0 %1188
  %v1190 = vsel %vm123, %v1184, 0.0
  %1191 = vadd.xlane.f32.xlu0 %v1190
  %v1192 = vpop.xlane.xlu0 %1191
  %v1193 = vmul.f32 %v1189, %v130
  %v1194 = vmul.f32 %v1192, %v130
  %v1195 = vsub.f32 %v1183, %v1193
  %v1196 = vsub.f32 %v1184, %v1194
  %v1197 = vmul.f32 %v1195, %v1195
  %v1198 = vmul.f32 %v1196, %v1196
  %v1199 = vsel %vm123, %v1197, 0.0
  %1200 = vadd.xlane.f32.xlu0 %v1199
  %v1201 = vpop.xlane.xlu0 %1200
  %v1202 = vsel %vm123, %v1198, 0.0
  %1203 = vadd.xlane.f32.xlu0 %v1202
  %v1204 = vpop.xlane.xlu0 %1203
  %v1205 = vmul.f32 %v1201, %v130
  %v1206 = vmul.f32 %v1204, %v130
  %v1207 = vadd.f32 %v1205, 1e-12
  %v1208 = vadd.f32 %v1206, 1e-12
  %v1209 = vrsqrt.pop %v1207
  %v1210 = vrsqrt.pop %v1208
  %v1211 = vmul.f32 %v1195, %v1209
  %v1212 = vmul.f32 %v1196, %v1210
  %v1213 = vlaneseq
  %v1214 = vshrl.u32 %v1213, 7
  %v1215 = vsub.s32 0, %v1214
  %v1216 = vrot.slane %v1185, %v1215
  %v1217 = vmul.f32 %v1211, %v1216
  %v1218 = vmul.f32 %v1212, %v1216
  %v1219 = vlaneseq
  %v1220 = vshrl.u32 %v1219, 7
  %v1221 = vsub.s32 0, %v1220
  %v1222 = vrot.slane %v1186, %v1221
  %v1223 = vadd.f32 %v1217, %v1222
  %v1224 = vadd.f32 %v1218, %v1222
  %s1225 = scalar_lea.vmem %s6, 48
  %v1226 = vld [vmem:[%s1225] sm:$0xf]
  %v1227 = vld [vmem:[%s1225 + $0x4] sm:$0xf]
  %v1228 = vld [vmem:[%s1225 + $0x8] sm:$0xf]
  %v1229 = vld [vmem:[%s1225 + $0xc] sm:$0xf]
  %v1230 = vld [vmem:[%s1225 + $0x10] sm:$0xf]
  %v1231 = vld [vmem:[%s1225 + $0x14] sm:$0xf]
  %v1232 = vld [vmem:[%s1225 + $0x18] sm:$0xf]
  %v1233 = vld [vmem:[%s1225 + $0x1c] sm:$0xf]
  %v1234 = vld [vmem:[%s1225 + $0x20] sm:$0xf]
  %v1235 = vld [vmem:[%s1225 + $0x24] sm:$0xf]
  %v1236 = vld [vmem:[%s1225 + $0x28] sm:$0xf]
  %v1237 = vld [vmem:[%s1225 + $0x2c] sm:$0xf]
  %v1238 = vpack.c.bf16 %v1224, %v1223
  %v1239 = vld [vmem:[%s4 + $0xe] sm:$0x1]
  %v1240 = vlaneseq
  %v1241 = vshrl.u32 %v1240, 7
  %v1242 = vsub.s32 0, %v1241
  %v1243 = vrot.slane %v1239, %v1242
  %v1248 = vunpack.c.l.b16 %v1226
  %v1249 = vunpack.c.l.b16 %v1227
  %v1250 = vunpack.c.l.b16 %v1228
  %v1251 = vunpack.c.l.b16 %v1229
  %v1252 = vpack.c.b16 %v1249, %v1248
  %v1253 = vpack.c.b16 %v1251, %v1250
  %v1257 = vsel %vm123, %v1238, 0
  %1259 = vmatprep.subr.bf16.mxu0 0
  %1260 = vmatpush1.bf16.msra.mxu0 %v1252
  %1261 = vmatprep.subr.bf16.mxu0 0
  %1262 = vmatpush1.bf16.msra.mxu0 %v1253
  %1263 = vmatprep.subr.bf16.mxu0 0
  %1264 = vmatpush1.bf16.msra.mxu0 0
  %1265 = vmatprep.subr.bf16.mxu0 0
  %1266 = vmatpush1.bf16.msra.mxu0 0
  %1267 = vmatprep.subr.bf16.mxu0 0
  %1268 = vmatpush1.bf16.msra.mxu0 0
  %1269 = vmatprep.subr.bf16.mxu0 0
  %1270 = vmatpush1.bf16.msra.mxu0 0
  %1271 = vmatprep.subr.bf16.mxu0 0
  %1272 = vmatpush1.bf16.msra.mxu0 0
  %1273 = vmatprep.subr.bf16.mxu0 0
  %1274 = vmatpush1.bf16.msra.mxu0 0
  %1275 = vmatprep.subr.bf16.mxu0 0
  %1276 = vmatpush1.bf16.msra.mxu0 0
  %1277 = vmatprep.subr.bf16.mxu0 0
  %1278 = vmatpush1.bf16.msra.mxu0 0
  %1279 = vmatprep.subr.bf16.mxu0 0
  %1280 = vmatpush1.bf16.msra.mxu0 0
  %1281 = vmatprep.subr.bf16.mxu0 0
  %1282 = vmatpush1.bf16.msra.mxu0 0
  %1283 = vmatprep.subr.bf16.mxu0 0
  %1284 = vmatpush1.bf16.msra.mxu0 0
  %1285 = vmatprep.subr.bf16.mxu0 0
  %1286 = vmatpush1.bf16.msra.mxu0 0
  %1287 = vmatprep.subr.bf16.mxu0 0
  %1288 = vmatpush1.bf16.msra.mxu0 0
  %1289 = vmatprep.subr.bf16.mxu0 0
  %1290 = vmatpush1.bf16.msra.mxu0 0
  %1291 = vmatprep.mubr.bf16.mxu0 0
  %1292 = vmatmul.mubr.bf16.gmra.mrb[0].mxu0 %v1257
  %v1293 = vpop.f32.mrb[0].mxu0
  %v1294 = vadd.f32 %v1243, %v1293
  %v1295 = vpop.f32.mrb[0].mxu0
  %v1296 = vpop.f32.mrb[0].mxu0
  %v1297 = vadd.f32 %v1243, %v1296
  %v1298 = vpop.f32.mrb[0].mxu0
  %1299 = vdwg.mxu0
  %v1300 = vmul.f32 %v1294, %v1294
  %v1301 = vmul.f32 %v1297, %v1297
  %v1302 = vmul.f32 %v1294, %v1300
  %v1303 = vmul.f32 %v1297, %v1301
  %v1304 = vmul.f32 %v1302, 0.044715
  %v1305 = vmul.f32 %v1303, 0.044715
  %v1306 = vadd.f32 %v1294, %v1304
  %v1307 = vadd.f32 %v1297, %v1305
  %v1308 = vmul.f32 %v1306, 0.7978846
  %v1309 = vmul.f32 %v1307, 0.7978846
  %v1310 = vtanh.pop %v1308
  %v1311 = vtanh.pop %v1309
  %v1312 = vadd.f32 %v1310, 1.0
  %v1313 = vadd.f32 %v1311, 1.0
  %v1314 = vmul.f32 %v1312, 0.5
  %v1315 = vmul.f32 %v1313, 0.5
  %v1316 = vmul.f32 %v1294, %v1314
  %v1317 = vmul.f32 %v1297, %v1315
  %v1318 = vpack.c.bf16 %v1317, %v1316
  %v1319 = vld [vmem:[%s4 + $0xf] sm:$0x1]
  %v1320 = vlaneseq
  %v1321 = vshrl.u32 %v1320, 7
  %v1322 = vsub.s32 0, %v1321
  %v1323 = vrot.slane %v1319, %v1322
  %v1332 = vunpack.c.l.b16 %v1230
  %v1333 = vunpack.c.l.b16 %v1231
  %v1334 = vunpack.c.l.b16 %v1232
  %v1335 = vunpack.c.l.b16 %v1233
  %v1336 = vunpack.c.l.b16 %v1234
  %v1337 = vunpack.c.l.b16 %v1235
  %v1338 = vunpack.c.l.b16 %v1236
  %v1339 = vunpack.c.l.b16 %v1237
  %v1340 = vpack.c.b16 %v1333, %v1332
  %v1341 = vpack.c.b16 %v1335, %v1334
  %v1342 = vpack.c.b16 %v1337, %v1336
  %v1343 = vpack.c.b16 %v1339, %v1338
  %v1349 = vsel %vm76, %v1318, 0
  %1351 = vmatprep.subr.bf16.mxu0 0
  %1352 = vmatpush1.bf16.msra.mxu0 %v1340
  %1353 = vmatprep.subr.bf16.mxu0 0
  %1354 = vmatpush1.bf16.msra.mxu0 %v1341
  %1355 = vmatprep.subr.bf16.mxu0 0
  %1356 = vmatpush1.bf16.msra.mxu0 %v1342
  %1357 = vmatprep.subr.bf16.mxu0 0
  %1358 = vmatpush1.bf16.msra.mxu0 %v1343
  %1359 = vmatprep.subr.bf16.mxu0 0
  %1360 = vmatpush1.bf16.msra.mxu0 0
  %1361 = vmatprep.subr.bf16.mxu0 0
  %1362 = vmatpush1.bf16.msra.mxu0 0
  %1363 = vmatprep.subr.bf16.mxu0 0
  %1364 = vmatpush1.bf16.msra.mxu0 0
  %1365 = vmatprep.subr.bf16.mxu0 0
  %1366 = vmatpush1.bf16.msra.mxu0 0
  %1367 = vmatprep.subr.bf16.mxu0 0
  %1368 = vmatpush1.bf16.msra.mxu0 0
  %1369 = vmatprep.subr.bf16.mxu0 0
  %1370 = vmatpush1.bf16.msra.mxu0 0
  %1371 = vmatprep.subr.bf16.mxu0 0
  %1372 = vmatpush1.bf16.msra.mxu0 0
  %1373 = vmatprep.subr.bf16.mxu0 0
  %1374 = vmatpush1.bf16.msra.mxu0 0
  %1375 = vmatprep.subr.bf16.mxu0 0
  %1376 = vmatpush1.bf16.msra.mxu0 0
  %1377 = vmatprep.subr.bf16.mxu0 0
  %1378 = vmatpush1.bf16.msra.mxu0 0
  %1379 = vmatprep.subr.bf16.mxu0 0
  %1380 = vmatpush1.bf16.msra.mxu0 0
  %1381 = vmatprep.subr.bf16.mxu0 0
  %1382 = vmatpush1.bf16.msra.mxu0 0
  %1383 = vmatprep.mubr.bf16.mxu0 0
  %1384 = vmatmul.mubr.bf16.gmra.mrb[0].mxu0 %v1349
  %v1385 = vpop.f32.mrb[0].mxu0
  %v1386 = vadd.f32 %v1323, %v1385
  %v1387 = vpop.f32.mrb[0].mxu0
  %v1388 = vpop.f32.mrb[0].mxu0
  %v1389 = vadd.f32 %v1323, %v1388
  %v1390 = vpop.f32.mrb[0].mxu0
  %1391 = vdwg.mxu0
  %v1392 = vadd.f32 %v1386, %v1223
  %v1393 = vadd.f32 %v1389, %v1224
  %v1394 = vld [vmem:[%s4 + $0x10] sm:$0x1]
  %v1395 = vld [vmem:[%s4 + $0x11] sm:$0x1]
  %v1396 = vsel %vm123, %v1392, 0.0
  %1397 = vadd.xlane.f32.xlu0 %v1396
  %v1398 = vpop.xlane.xlu0 %1397
  %v1399 = vsel %vm123, %v1393, 0.0
  %1400 = vadd.xlane.f32.xlu0 %v1399
  %v1401 = vpop.xlane.xlu0 %1400
  %v1402 = vmul.f32 %v1398, %v130
  %v1403 = vmul.f32 %v1401, %v130
  %v1404 = vsub.f32 %v1392, %v1402
  %v1405 = vsub.f32 %v1393, %v1403
  %v1406 = vmul.f32 %v1404, %v1404
  %v1407 = vmul.f32 %v1405, %v1405
  %v1408 = vsel %vm123, %v1406, 0.0
  %1409 = vadd.xlane.f32.xlu0 %v1408
  %v1410 = vpop.xlane.xlu0 %1409
  %v1411 = vsel %vm123, %v1407, 0.0
  %1412 = vadd.xlane.f32.xlu0 %v1411
  %v1413 = vpop.xlane.xlu0 %1412
  %v1414 = vmul.f32 %v1410, %v130
  %v1415 = vmul.f32 %v1413, %v130
  %v1416 = vadd.f32 %v1414, 1e-12
  %v1417 = vadd.f32 %v1415, 1e-12
  %v1418 = vrsqrt.pop %v1416
  %v1419 = vrsqrt.pop %v1417
  %v1420 = vmul.f32 %v1404, %v1418
  %v1421 = vmul.f32 %v1405, %v1419
  %v1422 = vlaneseq
  %v1423 = vshrl.u32 %v1422, 7
  %v1424 = vsub.s32 0, %v1423
  %v1425 = vrot.slane %v1394, %v1424
  %v1426 = vmul.f32 %v1420, %v1425
  %v1427 = vmul.f32 %v1421, %v1425
  %v1428 = vlaneseq
  %v1429 = vshrl.u32 %v1428, 7
  %v1430 = vsub.s32 0, %v1429
  %v1431 = vrot.slane %v1395, %v1430
  %v1432 = vadd.f32 %v1426, %v1431
  %v1433 = vadd.f32 %v1427, %v1431
  %v1434 = vpack.c.bf16 %v1433, %v1432
  %s1435 = scalar_lea.vmem %s5, 32
  %v1436 = vld [vmem:[%s1435] sm:$0xf]
  %v1437 = vld [vmem:[%s1435 + $0x4] sm:$0xf]
  %v1438 = vld [vmem:[%s1435 + $0x8] sm:$0xf]
  %v1439 = vld [vmem:[%s1435 + $0xc] sm:$0xf]
  %v1440 = vld [vmem:[%s4 + $0x12] sm:$0x1]
  %v1441 = vlaneseq
  %v1442 = vshrl.u32 %v1441, 7
  %v1443 = vsub.s32 0, %v1442
  %v1444 = vrot.slane %v1440, %v1443
  %v1449 = vunpack.c.l.b16 %v1436
  %v1450 = vunpack.c.l.b16 %v1437
  %v1451 = vunpack.c.l.b16 %v1438
  %v1452 = vunpack.c.l.b16 %v1439
  %v1453 = vpack.c.b16 %v1450, %v1449
  %v1454 = vpack.c.b16 %v1452, %v1451
  %v1458 = vsel %vm123, %v1434, 0
  %1460 = vmatprep.subr.bf16.mxu0 0
  %1461 = vmatpush1.bf16.msra.mxu0 %v1453
  %1462 = vmatprep.subr.bf16.mxu0 0
  %1463 = vmatpush1.bf16.msra.mxu0 %v1454
  %1464 = vmatprep.subr.bf16.mxu0 0
  %1465 = vmatpush1.bf16.msra.mxu0 0
  %1466 = vmatprep.subr.bf16.mxu0 0
  %1467 = vmatpush1.bf16.msra.mxu0 0
  %1468 = vmatprep.subr.bf16.mxu0 0
  %1469 = vmatpush1.bf16.msra.mxu0 0
  %1470 = vmatprep.subr.bf16.mxu0 0
  %1471 = vmatpush1.bf16.msra.mxu0 0
  %1472 = vmatprep.subr.bf16.mxu0 0
  %1473 = vmatpush1.bf16.msra.mxu0 0
  %1474 = vmatprep.subr.bf16.mxu0 0
  %1475 = vmatpush1.bf16.msra.mxu0 0
  %1476 = vmatprep.subr.bf16.mxu0 0
  %1477 = vmatpush1.bf16.msra.mxu0 0
  %1478 = vmatprep.subr.bf16.mxu0 0
  %1479 = vmatpush1.bf16.msra.mxu0 0
  %1480 = vmatprep.subr.bf16.mxu0 0
  %1481 = vmatpush1.bf16.msra.mxu0 0
  %1482 = vmatprep.subr.bf16.mxu0 0
  %1483 = vmatpush1.bf16.msra.mxu0 0
  %1484 = vmatprep.subr.bf16.mxu0 0
  %1485 = vmatpush1.bf16.msra.mxu0 0
  %1486 = vmatprep.subr.bf16.mxu0 0
  %1487 = vmatpush1.bf16.msra.mxu0 0
  %1488 = vmatprep.subr.bf16.mxu0 0
  %1489 = vmatpush1.bf16.msra.mxu0 0
  %1490 = vmatprep.subr.bf16.mxu0 0
  %1491 = vmatpush1.bf16.msra.mxu0 0
  %1492 = vmatprep.mubr.bf16.mxu0 0
  %1493 = vmatmul.mubr.bf16.gmra.mrb[0].mxu0 %v1458
  %v1494 = vpop.f32.mrb[0].mxu0
  %v1495 = vadd.f32 %v1444, %v1494
  %v1496 = vpop.f32.mrb[0].mxu0
  %v1497 = vpop.f32.mrb[0].mxu0
  %v1498 = vadd.f32 %v1444, %v1497
  %v1499 = vpop.f32.mrb[0].mxu0
  %1500 = vdwg.mxu0
  %1501 = vst [vmem:[%s7] sm:$0xff] %v1495
  %1502 = vst [vmem:[%s7 + $0x8] sm:$0xff] %v1498
  // Predicated region
  $region30: #{bertsum_forward.1} parent=0 // pred_check
    _
  $region31: #{bertsum_forward.1} parent=0 // pred_check_branch
    %1504 = sbr.rel (0) target = $region33
  $region32: #{bertsum_forward.1} parent=0 // pred_region
    _
  $region33: #{bertsum_forward.1} parent=0 // pred_fallthru
    _
  // Predicated region
  $region34: #{bertsum_forward.1} parent=0 // pred_check
    _
  $region35: #{bertsum_forward.1} parent=0 // pred_check_branch
    %1506 = sbr.rel (0) target = $region37
  $region36: #{bertsum_forward.1} parent=0 // pred_region
    _
  $region37: #{bertsum_forward.1} parent=0 // pred_fallthru
    _

</llo_original>
